<compile_context>
chip_gen: v7x
topology: tpu7x:2x2x1
jax: 0.10.0
libtpu: 0.0.40
codegen_flags: <defaults>
</compile_context>

<pallas_src>
import functools

import jax
import jax.numpy as jnp
import numpy as np
from jax.experimental import pallas as pl
from jax.experimental.pallas import tpu as pltpu


# --------------------------------------------------------------------------------------
# Pallas kernel
# --------------------------------------------------------------------------------------
def _make_rim_kernel(cfg):
    B, I, N, H = cfg["B"], cfg["I"], cfg["N"], cfg["H"]
    dk, dv = cfg["dk"], cfg["dv"]
    ck, cq, cv, hc = cfg["ck"], cfg["cq"], cfg["cv"], cfg["hc"]
    k = cfg["k"]
    NH = N * H
    assert cv == H, "RIMCell forces comm_value_size == hidden_size"
    assert cq == ck, "comm query/key sizes must match for dot-product attention"
    cblk = hc * ck            # per-unit comm query/key block width (lanes)
    vblk = hc * cv            # per-unit comm value block width (lanes)
    QW = N * hc * cq
    KW = N * hc * ck
    VW = N * hc * cv
    inv_sqrt_dk = float(1.0 / np.sqrt(dk))
    inv_sqrt_ck = float(1.0 / np.sqrt(ck))

    def kernel(x_ref, hs_ref, cs_ref,
               wk_ref, wv_ref, wq_ref, wih_ref, wqkvc_ref, woc_ref,
               bkr_ref, bvr_ref,
               seldk_ref, expdv_ref, exph_ref, exphc_ref, selc_ref, expcv_ref,
               hs_out_ref, cs_out_ref, mh_out_ref):
        f32 = jnp.float32
        bf16 = jnp.bfloat16
        dotf = functools.partial(jnp.dot, preferred_element_type=f32)

        x = x_ref[...]                 # (B, I) f32
        h_old = hs_ref[...]            # (B, N*H) f32
        c_old = cs_ref[...]            # (B, N*H) f32
        bkr = bkr_ref[...]             # (1, N*dk) f32  == replicated null-slot keys
        bvr = bvr_ref[...]             # (1, N*dv) f32  == replicated null-slot values

        # ---------- input attention: replicated key/value of the real input ----------
        # (score path stays f32 so the exact-match mask check vs. torch.topk holds)
        kr = dotf(x, wk_ref[...]) + bkr                                   # (B, N*dk)
        vr = dotf(x.astype(bf16), wv_ref[...]) + bvr                      # (B, N*dv)

        q_all = dotf(h_old, wq_ref[...])                                  # (B, N*dk) block-diag queries
        # sublane-stack {real, null} products -> one selection matmul for both scores
        qk = jnp.concatenate([q_all * kr, q_all * bkr], axis=0)           # (2B, N*dk)
        s01 = dotf(qk, seldk_ref[...]) * inv_sqrt_dk                      # (2B, N)
        s0 = s01[:B]                                                      # score vs real input
        s1 = s01[B:]                                                      # score vs null input

        # ---------- top-k mask via vectorized rank counting ----------
        gt = jnp.where(s0[:, None, :] > s0[:, :, None], 1.0, 0.0)         # (B, N, N)
        rank = jnp.sum(gt, axis=-1)                                       # (B, N)
        mask = jnp.where(rank < float(k), 1.0, 0.0)                       # (B, N)

        # ---------- 2-way softmax over {real, null}, masked per-unit LSTM input ----------
        mx = jnp.maximum(s0, s1)
        e0 = jnp.exp(s0 - mx)
        e1 = jnp.exp(s1 - mx)
        inv_den = mask * pl.reciprocal(e0 + e1, approx=True)              # mask folds query gating in
        p01 = jnp.concatenate([e0 * inv_den, e1 * inv_den], axis=0)       # (2B, N)
        pe = dotf(p01, expdv_ref[...])                                    # (2B, N*dv) expanded probs
        inp = pe[:B] * vr + pe[B:] * bvr                                  # (B, N*dv)

        # ---------- GroupLSTM: single [inp|h] x [Wi;Wh] gate-major block-diag matmul ----------
        ih = jnp.concatenate([inp, h_old], axis=1).astype(bf16)           # (B, N*dv + N*H)
        pre = dotf(ih, wih_ref[...])                                      # (B, 4*N*H), 128-aligned gates
        i_t = jax.nn.sigmoid(pre[:, 0 * NH:1 * NH])
        f_t = jax.nn.sigmoid(pre[:, 1 * NH:2 * NH])
        o_t = jax.nn.sigmoid(pre[:, 2 * NH:3 * NH])
        g_t = jnp.tanh(pre[:, 3 * NH:4 * NH])
        c_new = c_old * f_t + i_t * g_t
        h_new = o_t * jnp.tanh(c_new)                                     # (B, N*H)

        # ---------- communication attention (unit-major layout, peers via lane roll) ----------
        qkv = dotf(h_new.astype(bf16), wqkvc_ref[...])                    # (B, QW+KW+VW) one matmul
        qc = qkv[:, :QW]
        kc = qkv[:, QW:QW + KW]
        vc = qkv[:, QW + KW:]
        mask_nh = dotf(mask, exphc_ref[...])                              # (B, N*hc) query-unit mask

        # roll whole unit-blocks so shift s pairs unit n with peer (n - s) mod N
        kc_s = [kc if s == 0 else pltpu.roll(kc, shift=s * cblk, axis=1) for s in range(N)]
        vc_s = [vc if s == 0 else pltpu.roll(vc, shift=s * vblk, axis=1) for s in range(N)]

        # one sublane-stacked selection matmul for all N shifts' scores
        prods = jnp.concatenate([qc * kc_s[s] for s in range(N)], axis=0)  # (N*B, KW)
        sc_all = dotf(prods, selc_ref[...]) * inv_sqrt_ck                  # (N*B, N*hc)
        sc = [sc_all[s * B:(s + 1) * B] for s in range(N)]                 # N x (B, N*hc)

        m_c = sc[0]
        for s in range(1, N):
            m_c = jnp.maximum(m_c, sc[s])
        ex = [jnp.exp(sc[s] - m_c) for s in range(N)]
        den = ex[0]
        for s in range(1, N):
            den = den + ex[s]
        inv_c = mask_nh * pl.reciprocal(den, approx=True)                  # softmax denom + query mask

        # one sublane-stacked expansion matmul for all N shifts' attention weights
        w_all = jnp.concatenate([ex[s] * inv_c for s in range(N)], axis=0)  # (N*B, N*hc)
        we = dotf(w_all, expcv_ref[...])                                    # (N*B, VW)
        ctx = we[:B] * vc_s[0]
        for s in range(1, N):
            ctx = ctx + we[s * B:(s + 1) * B] * vc_s[s]                     # (B, N*hc*cv)

        out = dotf(ctx.astype(bf16), woc_ref[...]) + h_new                  # (B, N*H)

        # ---------- mask-gated residual state update (lane-dense stores only) ----------
        mH = dotf(mask, exph_ref[...])                                      # (B, N*H)
        hs_out_ref[...] = mH * out + (1.0 - mH) * h_old
        cs_out_ref[...] = mH * c_new + (1.0 - mH) * c_old
        mh_out_ref[...] = mH                                                # wrapper derives (B, N) mask

    return kernel


# --------------------------------------------------------------------------------------
# Host-side packing (done once): block-diag / gate-major weights, folded REP_*, bf16 cast
# Returned tuple order MUST match the kernel argument order.
# --------------------------------------------------------------------------------------
def pack_params(params, cfg):
    I, N, H = cfg["I"], cfg["N"], cfg["H"]
    dk, dv = cfg["dk"], cfg["dv"]
    ck, cq, cv, hc = cfg["ck"], cfg["cq"], cfg["cv"], cfg["hc"]
    f32 = np.float32

    def bd(W):
        # (N, din, dout) -> (N*din, N*dout) block-diagonal
        W = np.asarray(W, f32)
        n, din, dout = W.shape
        out = np.zeros((n * din, n * dout), f32)
        for b in range(n):
            out[b * din:(b + 1) * din, b * dout:(b + 1) * dout] = W[b]
        return out

    def bd_gate_major(W):
        # (N, din, 4H) -> (N*din, 4*N*H) block-diagonal, columns ordered (gate, unit, hidden)
        W = np.asarray(W, f32)
        n, din, _ = W.shape
        out = np.zeros((n * din, 4 * n * H), f32)
        for b in range(n):
            for g in range(4):
                out[b * din:(b + 1) * din,
                    g * n * H + b * H:g * n * H + (b + 1) * H] = W[b, :, g * H:(g + 1) * H]
        return out

    Wk = np.asarray(params["Wk"], f32)
    Wv = np.asarray(params["Wv"], f32)
    bk = np.asarray(params["bk"], f32)
    bv = np.asarray(params["bv"], f32)
    eye, ones, kron = np.eye, np.ones, np.kron

    Wk_rep = np.tile(Wk, (1, N))                                  # (I, N*dk)  == Wk @ REP_dk
    Wv_rep = np.tile(Wv, (1, N))                                  # (I, N*dv)  == Wv @ REP_dv
    Wq_blk = bd(params["Wq"])                                     # (N*H, N*dk)
    Wih_gm = np.concatenate([bd_gate_major(params["Wi"]),         # (N*dv + N*H, 4*N*H)
                             bd_gate_major(params["Wh"])], axis=0)
    Wqkvc = np.concatenate([bd(params["Wqc"]), bd(params["Wkc"]), bd(params["Wvc"])],
                           axis=1)                                # (N*H, N*hc*(cq+ck+cv))
    Woc_blk = bd(params["Woc"])                                   # (N*hc*cv, N*cv)

    bk_rep = np.tile(bk, (1, N)).astype(f32)                      # (1, N*dk)  null-slot keys
    bv_rep = np.tile(bv, (1, N)).astype(f32)                      # (1, N*dv)  null-slot values

    SEL_dk = kron(eye(N, dtype=f32), ones((dk, 1), f32))          # (N*dk, N)
    EXP_dv = kron(eye(N, dtype=f32), ones((1, dv), f32))          # (N, N*dv)
    EXP_H = kron(eye(N, dtype=f32), ones((1, H), f32))            # (N, N*H)
    EXP_hc = kron(eye(N, dtype=f32), ones((1, hc), f32))          # (N, N*hc)
    SEL_c = kron(eye(N * hc, dtype=f32), ones((ck, 1), f32))      # (N*hc*ck, N*hc)
    EXP_cv = kron(eye(N * hc, dtype=f32), ones((1, cv), f32))     # (N*hc, N*hc*cv)

    bf16 = jnp.bfloat16
    return (
        jnp.asarray(Wk_rep, jnp.float32),   # score path: keep f32 (exact mask)
        jnp.asarray(Wv_rep, bf16),
        jnp.asarray(Wq_blk, jnp.float32),   # score path: keep f32 (exact mask)
        jnp.asarray(Wih_gm, bf16),
        jnp.asarray(Wqkvc, bf16),
        jnp.asarray(Woc_blk, bf16),
        jnp.asarray(bk_rep, jnp.float32),
        jnp.asarray(bv_rep, jnp.float32),
        jnp.asarray(SEL_dk, jnp.float32),
        jnp.asarray(EXP_dv, jnp.float32),
        jnp.asarray(EXP_H, jnp.float32),
        jnp.asarray(EXP_hc, jnp.float32),
        jnp.asarray(SEL_c, jnp.float32),
        jnp.asarray(EXP_cv, jnp.float32),
    )


# --------------------------------------------------------------------------------------
# Cached, jitted wrapper (pallas_call built once per (cfg, B))
# --------------------------------------------------------------------------------------
@functools.lru_cache(maxsize=None)
def _build_rim_fn(cfg_key):
    cfg = dict(cfg_key)
    B, N, H = cfg["B"], cfg["N"], cfg["H"]
    NH = N * H
    kernel = _make_rim_kernel(cfg)
    n_in = 17

    call = pl.pallas_call(
        kernel,
        out_shape=(
            jax.ShapeDtypeStruct((B, NH), jnp.float32),
            jax.ShapeDtypeStruct((B, NH), jnp.float32),
            jax.ShapeDtypeStruct((B, NH), jnp.float32),
        ),
        in_specs=[pl.BlockSpec(memory_space=pltpu.MemorySpace.VMEM) for _ in range(n_in)],
        out_specs=(
            pl.BlockSpec(memory_space=pltpu.MemorySpace.VMEM),
            pl.BlockSpec(memory_space=pltpu.MemorySpace.VMEM),
            pl.BlockSpec(memory_space=pltpu.MemorySpace.VMEM),
        ),
    )

    def fn(x, hs, cs, *packed):
        x2 = x.reshape(B, -1).astype(jnp.float32)
        hs_f = hs.reshape(B, NH).astype(jnp.float32)
        cs_f = cs.reshape(B, NH).astype(jnp.float32)
        hs_o, cs_o, mh = call(x2, hs_f, cs_f, *packed)
        mask = mh.reshape(B, N, H)[:, :, 0]          # lane-dense store in-kernel, slice here
        return hs_o.reshape(B, N, H), cs_o.reshape(B, N, H), mask

    return jax.jit(fn)


def rim_cell_pallas(x, hs, cs, packed, cfg):
    cfg_full = dict(cfg)
    cfg_full["B"] = int(x.shape[0])
    fn = _build_rim_fn(tuple(sorted(cfg_full.items())))
    return fn(x, hs, cs, *packed)


# --------------------------------------------------------------------------------------
# Deterministic parameter init (synthetic; shapes follow RIMCell.__init__)
# --------------------------------------------------------------------------------------
def init_params(key, cfg):
    I, N, H = cfg["I"], cfg["N"], cfg["H"]
    dk, dv = cfg["dk"], cfg["dv"]
    ck, cq, cv, hc = cfg["ck"], cfg["cq"], cfg["cv"], cfg["hc"]
    ks = jax.random.split(key, 12)

    def rnd(kk, shape, scale=0.05):
        return scale * jax.random.normal(kk, shape, dtype=jnp.float32)

    return dict(
        Wk=rnd(ks[0], (I, dk)), bk=rnd(ks[1], (1, dk)),
        Wv=rnd(ks[2], (I, dv)), bv=rnd(ks[3], (1, dv)),
        Wq=rnd(ks[4], (N, H, dk)),
        Wi=rnd(ks[5], (N, dv, 4 * H), 0.1),
        Wh=rnd(ks[6], (N, H, 4 * H), 0.1),
        Wqc=rnd(ks[7], (N, H, hc * cq)),
        Wkc=rnd(ks[8], (N, H, hc * ck)),
        Wvc=rnd(ks[9], (N, H, hc * cv)),
        Woc=rnd(ks[10], (N, hc * cv, cv)),
    )


# --------------------------------------------------------------------------------------
# Pure-JAX reference (faithful port of the PyTorch forward, eval-mode dropout)
# --------------------------------------------------------------------------------------
def rim_cell_reference(x, hs, cs, p, cfg):
    B, _, I = x.shape
    N, H = cfg["N"], cfg["H"]
    dk, ck, cv, hc, k = cfg["dk"], cfg["ck"], cfg["cv"], cfg["hc"], cfg["k"]

    xc = jnp.concatenate([x, jnp.zeros_like(x)], axis=1)                  # (B, 2, I)
    key_l = jnp.matmul(xc, p["Wk"]) + p["bk"][0]                          # (B, 2, dk)
    val_l = jnp.matmul(xc, p["Wv"]) + p["bv"][0]                          # (B, 2, dv)
    qry_l = jnp.einsum("bnh,nhd->bnd", hs, p["Wq"])                       # (B, N, dk)
    scores = jnp.einsum("bnd,bsd->bns", qry_l, key_l) / np.sqrt(dk)       # (B, N, 2)

    not_null = scores[:, :, 0]
    _, topi = jax.lax.top_k(not_null, k)
    mask = jnp.zeros((B, N), jnp.float32).at[jnp.arange(B)[:, None], topi].set(1.0)

    probs = jax.nn.softmax(scores, axis=-1)
    inputs = jnp.einsum("bns,bsd->bnd", probs, val_l) * mask[:, :, None]

    pre = (jnp.einsum("bnd,ndh->bnh", inputs, p["Wi"])
           + jnp.einsum("bnd,ndh->bnh", hs, p["Wh"]))
    i_t = jax.nn.sigmoid(pre[..., 0 * H:1 * H])
    f_t = jax.nn.sigmoid(pre[..., 1 * H:2 * H])
    o_t = jax.nn.sigmoid(pre[..., 2 * H:3 * H])
    g_t = jnp.tanh(pre[..., 3 * H:])
    c_t = cs * f_t + i_t * g_t
    h_t = o_t * jnp.tanh(c_t)

    q = jnp.einsum("bnh,nhd->bnd", h_t, p["Wqc"]).reshape(B, N, hc, -1).transpose(0, 2, 1, 3)
    kk = jnp.einsum("bnh,nhd->bnd", h_t, p["Wkc"]).reshape(B, N, hc, -1).transpose(0, 2, 1, 3)
    v = jnp.einsum("bnh,nhd->bnd", h_t, p["Wvc"]).reshape(B, N, hc, -1).transpose(0, 2, 1, 3)
    att = jnp.einsum("bhnd,bhmd->bhnm", q, kk) / np.sqrt(ck)
    att = jax.nn.softmax(att, axis=-1) * mask[:, None, :, None]
    ctx = jnp.einsum("bhnm,bhmd->bhnd", att, v)
    ctx = ctx.transpose(0, 2, 1, 3).reshape(B, N, hc * cv)
    out = jnp.einsum("bnd,ndh->bnh", ctx, p["Woc"]) + h_t

    hs_new = mask[:, :, None] * out + (1 - mask[:, :, None]) * hs
    cs_new = mask[:, :, None] * c_t + (1 - mask[:, :, None]) * cs
    return hs_new, cs_new, mask


# --------------------------------------------------------------------------------------
if __name__ == "__main__":
    cfg = dict(I=16, N=4, H=32, k=2,
               dk=32, dv=64,          # input_key/query_size, input_value_size
               ck=16, cq=16, cv=32,   # comm_key/query_size, comm_value_size (== hidden)
               hc=2)                  # num_comm_heads (num_input_heads = 1)

    key = jax.random.PRNGKey(0)
    kx, kh, kc_, kp = jax.random.split(key, 4)
    B = 2
    x = jax.random.normal(kx, (B, 1, cfg["I"]), dtype=jnp.float32)
    hs = 0.1 * jax.random.normal(kh, (B, cfg["N"], cfg["H"]), dtype=jnp.float32)
    cs = 0.1 * jax.random.normal(kc_, (B, cfg["N"], cfg["H"]), dtype=jnp.float32)
    params = init_params(kp, cfg)
    packed = pack_params(params, cfg)

    hs_new, cs_new, mask = rim_cell_pallas(x, hs, cs, packed, cfg)
    jax.block_until_ready((hs_new, cs_new, mask))

    hs_ref, cs_ref, mask_ref = rim_cell_reference(x, hs, cs, params, cfg)
    np.testing.assert_allclose(np.asarray(mask), np.asarray(mask_ref), atol=0)
    # bf16 weights on the value/LSTM/comm paths: tolerances re-verified for bf16 quantization.
    np.testing.assert_allclose(np.asarray(hs_new), np.asarray(hs_ref), rtol=2e-2, atol=5e-3)
    np.testing.assert_allclose(np.asarray(cs_new), np.asarray(cs_ref), rtol=2e-2, atol=5e-3)
    print("KERNEL_OK")
</pallas_src>

<mosaic_0001>
module attributes {stable_mosaic.version = 11 : i64} {
  func.func @kernel(%arg0: memref<2x16xf32, #tpu.memory_space<vmem>>, %arg1: memref<2x128xf32, #tpu.memory_space<vmem>>, %arg2: memref<2x128xf32, #tpu.memory_space<vmem>>, %arg3: memref<16x128xf32, #tpu.memory_space<vmem>>, %arg4: memref<16x256xbf16, #tpu.memory_space<vmem>>, %arg5: memref<128x128xf32, #tpu.memory_space<vmem>>, %arg6: memref<384x512xbf16, #tpu.memory_space<vmem>>, %arg7: memref<128x512xbf16, #tpu.memory_space<vmem>>, %arg8: memref<256x128xbf16, #tpu.memory_space<vmem>>, %arg9: memref<1x128xf32, #tpu.memory_space<vmem>>, %arg10: memref<1x256xf32, #tpu.memory_space<vmem>>, %arg11: memref<128x4xf32, #tpu.memory_space<vmem>>, %arg12: memref<4x256xf32, #tpu.memory_space<vmem>>, %arg13: memref<4x128xf32, #tpu.memory_space<vmem>>, %arg14: memref<4x8xf32, #tpu.memory_space<vmem>>, %arg15: memref<128x8xf32, #tpu.memory_space<vmem>>, %arg16: memref<8x256xf32, #tpu.memory_space<vmem>>, %arg17: memref<2x128xf32, #tpu.memory_space<vmem>>, %arg18: memref<2x128xf32, #tpu.memory_space<vmem>>, %arg19: memref<2x128xf32, #tpu.memory_space<vmem>>) attributes {dimension_semantics = [], scalar_prefetch = 0 : i64, scratch_operands = 0 : i64, tpu.core_type = #tpu.core_type<tc>} {
    %c0 = arith.constant 0 : index
    %c0_0 = arith.constant 0 : index
    %0 = vector.load %arg0[%c0, %c0_0] : memref<2x16xf32, #tpu.memory_space<vmem>>, vector<2x16xf32>
    %c0_1 = arith.constant 0 : index
    %c0_2 = arith.constant 0 : index
    %1 = vector.load %arg1[%c0_1, %c0_2] : memref<2x128xf32, #tpu.memory_space<vmem>>, vector<2x128xf32>
    %c0_3 = arith.constant 0 : index
    %c0_4 = arith.constant 0 : index
    %2 = vector.load %arg2[%c0_3, %c0_4] : memref<2x128xf32, #tpu.memory_space<vmem>>, vector<2x128xf32>
    %c0_5 = arith.constant 0 : index
    %c0_6 = arith.constant 0 : index
    %3 = vector.load %arg9[%c0_5, %c0_6] : memref<1x128xf32, #tpu.memory_space<vmem>>, vector<1x128xf32>
    %c0_7 = arith.constant 0 : index
    %c0_8 = arith.constant 0 : index
    %4 = vector.load %arg10[%c0_7, %c0_8] : memref<1x256xf32, #tpu.memory_space<vmem>>, vector<1x256xf32>
    %c0_9 = arith.constant 0 : index
    %c0_10 = arith.constant 0 : index
    %5 = vector.load %arg3[%c0_9, %c0_10] : memref<16x128xf32, #tpu.memory_space<vmem>>, vector<16x128xf32>
    %cst = arith.constant dense<0.000000e+00> : vector<2x128xf32>
    %6 = tpu.matmul %0, %5, %cst {dimension_numbers = #tpu.dot_dimension_numbers<[1], [0], [0], [1], [0, 0, 1, 1], [], []>} : vector<2x16xf32>, vector<16x128xf32>, vector<2x128xf32> -> vector<2x128xf32>
    %7 = vector.broadcast %3 : vector<1x128xf32> to vector<2x128xf32>
    %8 = arith.addf %6, %7 : vector<2x128xf32>
    %9 = arith.truncf %0 : vector<2x16xf32> to vector<2x16xbf16>
    %c0_11 = arith.constant 0 : index
    %c0_12 = arith.constant 0 : index
    %10 = vector.load %arg4[%c0_11, %c0_12] : memref<16x256xbf16, #tpu.memory_space<vmem>>, vector<16x256xbf16>
    %cst_13 = arith.constant dense<0.000000e+00> : vector<2x256xf32>
    %11 = tpu.matmul %9, %10, %cst_13 {dimension_numbers = #tpu.dot_dimension_numbers<[1], [0], [0], [1], [0, 0, 1, 1], [], []>} : vector<2x16xbf16>, vector<16x256xbf16>, vector<2x256xf32> -> vector<2x256xf32>
    %12 = vector.broadcast %4 : vector<1x256xf32> to vector<2x256xf32>
    %13 = arith.addf %11, %12 : vector<2x256xf32>
    %c0_14 = arith.constant 0 : index
    %c0_15 = arith.constant 0 : index
    %14 = vector.load %arg5[%c0_14, %c0_15] : memref<128x128xf32, #tpu.memory_space<vmem>>, vector<128x128xf32>
    %cst_16 = arith.constant dense<0.000000e+00> : vector<2x128xf32>
    %15 = tpu.matmul %1, %14, %cst_16 {dimension_numbers = #tpu.dot_dimension_numbers<[1], [0], [0], [1], [0, 0, 1, 1], [], []>} : vector<2x128xf32>, vector<128x128xf32>, vector<2x128xf32> -> vector<2x128xf32>
    %16 = arith.mulf %15, %8 : vector<2x128xf32>
    %17 = vector.broadcast %3 : vector<1x128xf32> to vector<2x128xf32>
    %18 = arith.mulf %15, %17 : vector<2x128xf32>
    %19 = tpu.concatenate %16, %18 in 0 : vector<2x128xf32>, vector<2x128xf32> -> vector<4x128xf32>
    %c0_17 = arith.constant 0 : index
    %c0_18 = arith.constant 0 : index
    %20 = vector.load %arg11[%c0_17, %c0_18] : memref<128x4xf32, #tpu.memory_space<vmem>>, vector<128x4xf32>
    %cst_19 = arith.constant dense<0.000000e+00> : vector<4x4xf32>
    %21 = tpu.matmul %19, %20, %cst_19 {dimension_numbers = #tpu.dot_dimension_numbers<[1], [0], [0], [1], [0, 0, 1, 1], [], []>} : vector<4x128xf32>, vector<128x4xf32>, vector<4x4xf32> -> vector<4x4xf32>
    %cst_20 = arith.constant 0.176776692 : f32
    %22 = vector.broadcast %cst_20 : f32 to vector<4x4xf32>
    %23 = arith.mulf %21, %22 : vector<4x4xf32>
    %24 = vector.extract_strided_slice %23 {offsets = [0, 0], sizes = [2, 4], strides = [1, 1]} : vector<4x4xf32> to vector<2x4xf32>
    %25 = vector.extract_strided_slice %23 {offsets = [2, 0], sizes = [2, 4], strides = [1, 1]} : vector<4x4xf32> to vector<2x4xf32>
    %26 = vector.shape_cast %24 : vector<2x4xf32> to vector<2x1x4xf32>
    %27 = vector.shape_cast %24 : vector<2x4xf32> to vector<2x4x1xf32>
    %28 = vector.broadcast %26 : vector<2x1x4xf32> to vector<2x4x4xf32>
    %29 = vector.broadcast %27 : vector<2x4x1xf32> to vector<2x4x4xf32>
    %30 = arith.cmpf ogt, %28, %29 : vector<2x4x4xf32>
    %cst_21 = arith.constant 1.000000e+00 : f32
    %cst_22 = arith.constant 0.000000e+00 : f32
    %31 = vector.broadcast %cst_21 : f32 to vector<2x4x4xf32>
    %32 = vector.broadcast %cst_22 : f32 to vector<2x4x4xf32>
    %33 = arith.select %30, %31, %32 : vector<2x4x4xi1>, vector<2x4x4xf32>
    %cst_23 = arith.constant dense<0.000000e+00> : vector<2x4xf32>
    %34 = vector.multi_reduction <add>, %33, %cst_23 [2] : vector<2x4x4xf32> to vector<2x4xf32>
    %cst_24 = arith.constant 2.000000e+00 : f32
    %35 = vector.broadcast %cst_24 : f32 to vector<2x4xf32>
    %36 = arith.cmpf olt, %34, %35 : vector<2x4xf32>
    %cst_25 = arith.constant 1.000000e+00 : f32
    %cst_26 = arith.constant 0.000000e+00 : f32
    %37 = vector.broadcast %cst_25 : f32 to vector<2x4xf32>
    %38 = vector.broadcast %cst_26 : f32 to vector<2x4xf32>
    %39 = arith.select %36, %37, %38 : vector<2x4xi1>, vector<2x4xf32>
    %40 = arith.maximumf %24, %25 : vector<2x4xf32>
    %41 = arith.subf %24, %40 : vector<2x4xf32>
    %42 = math.exp %41 : vector<2x4xf32>
    %43 = arith.subf %25, %40 : vector<2x4xf32>
    %44 = math.exp %43 : vector<2x4xf32>
    %45 = arith.addf %42, %44 : vector<2x4xf32>
    %46 = tpu.reciprocal %45 {approx = true} : vector<2x4xf32> -> vector<2x4xf32>
    %47 = arith.mulf %39, %46 : vector<2x4xf32>
    %48 = arith.mulf %42, %47 : vector<2x4xf32>
    %49 = arith.mulf %44, %47 : vector<2x4xf32>
    %50 = tpu.concatenate %48, %49 in 0 : vector<2x4xf32>, vector<2x4xf32> -> vector<4x4xf32>
    %c0_27 = arith.constant 0 : index
    %c0_28 = arith.constant 0 : index
    %51 = vector.load %arg12[%c0_27, %c0_28] : memref<4x256xf32, #tpu.memory_space<vmem>>, vector<4x256xf32>
    %cst_29 = arith.constant dense<0.000000e+00> : vector<4x256xf32>
    %52 = tpu.matmul %50, %51, %cst_29 {dimension_numbers = #tpu.dot_dimension_numbers<[1], [0], [0], [1], [0, 0, 1, 1], [], []>} : vector<4x4xf32>, vector<4x256xf32>, vector<4x256xf32> -> vector<4x256xf32>
    %53 = vector.extract_strided_slice %52 {offsets = [0, 0], sizes = [2, 256], strides = [1, 1]} : vector<4x256xf32> to vector<2x256xf32>
    %54 = arith.mulf %53, %13 : vector<2x256xf32>
    %55 = vector.extract_strided_slice %52 {offsets = [2, 0], sizes = [2, 256], strides = [1, 1]} : vector<4x256xf32> to vector<2x256xf32>
    %56 = vector.broadcast %4 : vector<1x256xf32> to vector<2x256xf32>
    %57 = arith.mulf %55, %56 : vector<2x256xf32>
    %58 = arith.addf %54, %57 : vector<2x256xf32>
    %59 = tpu.concatenate %58, %1 in 1 : vector<2x256xf32>, vector<2x128xf32> -> vector<2x384xf32>
    %60 = arith.truncf %59 : vector<2x384xf32> to vector<2x384xbf16>
    %c0_30 = arith.constant 0 : index
    %c0_31 = arith.constant 0 : index
    %61 = vector.load %arg6[%c0_30, %c0_31] : memref<384x512xbf16, #tpu.memory_space<vmem>>, vector<384x512xbf16>
    %cst_32 = arith.constant dense<0.000000e+00> : vector<2x512xf32>
    %62 = tpu.matmul %60, %61, %cst_32 {dimension_numbers = #tpu.dot_dimension_numbers<[1], [0], [0], [1], [0, 0, 1, 1], [], []>} : vector<2x384xbf16>, vector<384x512xbf16>, vector<2x512xf32> -> vector<2x512xf32>
    %63 = vector.extract_strided_slice %62 {offsets = [0, 0], sizes = [2, 128], strides = [1, 1]} : vector<2x512xf32> to vector<2x128xf32>
    %64 = arith.negf %63 : vector<2x128xf32>
    %65 = math.exp %64 : vector<2x128xf32>
    %cst_33 = arith.constant 1.000000e+00 : f32
    %66 = vector.broadcast %cst_33 : f32 to vector<2x128xf32>
    %67 = arith.addf %66, %65 : vector<2x128xf32>
    %68 = arith.divf %66, %67 : vector<2x128xf32>
    %69 = vector.extract_strided_slice %62 {offsets = [0, 128], sizes = [2, 128], strides = [1, 1]} : vector<2x512xf32> to vector<2x128xf32>
    %70 = arith.negf %69 : vector<2x128xf32>
    %71 = math.exp %70 : vector<2x128xf32>
    %cst_34 = arith.constant 1.000000e+00 : f32
    %72 = vector.broadcast %cst_34 : f32 to vector<2x128xf32>
    %73 = arith.addf %72, %71 : vector<2x128xf32>
    %74 = arith.divf %72, %73 : vector<2x128xf32>
    %75 = vector.extract_strided_slice %62 {offsets = [0, 256], sizes = [2, 128], strides = [1, 1]} : vector<2x512xf32> to vector<2x128xf32>
    %76 = arith.negf %75 : vector<2x128xf32>
    %77 = math.exp %76 : vector<2x128xf32>
    %cst_35 = arith.constant 1.000000e+00 : f32
    %78 = vector.broadcast %cst_35 : f32 to vector<2x128xf32>
    %79 = arith.addf %78, %77 : vector<2x128xf32>
    %80 = arith.divf %78, %79 : vector<2x128xf32>
    %81 = vector.extract_strided_slice %62 {offsets = [0, 384], sizes = [2, 128], strides = [1, 1]} : vector<2x512xf32> to vector<2x128xf32>
    %82 = math.tanh %81 : vector<2x128xf32>
    %83 = arith.mulf %2, %74 : vector<2x128xf32>
    %84 = arith.mulf %68, %82 : vector<2x128xf32>
    %85 = arith.addf %83, %84 : vector<2x128xf32>
    %86 = math.tanh %85 : vector<2x128xf32>
    %87 = arith.mulf %80, %86 : vector<2x128xf32>
    %88 = arith.truncf %87 : vector<2x128xf32> to vector<2x128xbf16>
    %c0_36 = arith.constant 0 : index
    %c0_37 = arith.constant 0 : index
    %89 = vector.load %arg7[%c0_36, %c0_37] : memref<128x512xbf16, #tpu.memory_space<vmem>>, vector<128x512xbf16>
    %cst_38 = arith.constant dense<0.000000e+00> : vector<2x512xf32>
    %90 = tpu.matmul %88, %89, %cst_38 {dimension_numbers = #tpu.dot_dimension_numbers<[1], [0], [0], [1], [0, 0, 1, 1], [], []>} : vector<2x128xbf16>, vector<128x512xbf16>, vector<2x512xf32> -> vector<2x512xf32>
    %91 = vector.extract_strided_slice %90 {offsets = [0, 0], sizes = [2, 128], strides = [1, 1]} : vector<2x512xf32> to vector<2x128xf32>
    %92 = vector.extract_strided_slice %90 {offsets = [0, 128], sizes = [2, 128], strides = [1, 1]} : vector<2x512xf32> to vector<2x128xf32>
    %93 = vector.extract_strided_slice %90 {offsets = [0, 256], sizes = [2, 256], strides = [1, 1]} : vector<2x512xf32> to vector<2x256xf32>
    %c0_39 = arith.constant 0 : index
    %c0_40 = arith.constant 0 : index
    %94 = vector.load %arg14[%c0_39, %c0_40] : memref<4x8xf32, #tpu.memory_space<vmem>>, vector<4x8xf32>
    %cst_41 = arith.constant dense<0.000000e+00> : vector<2x8xf32>
    %95 = tpu.matmul %39, %94, %cst_41 {dimension_numbers = #tpu.dot_dimension_numbers<[1], [0], [0], [1], [0, 0, 1, 1], [], []>} : vector<2x4xf32>, vector<4x8xf32>, vector<2x8xf32> -> vector<2x8xf32>
    %c32_i32 = arith.constant 32 : i32
    %96 = tpu.dynamic_rotate %92 by %c32_i32 dim 1 : vector<2x128xf32>, i32 -> vector<2x128xf32>
    %c64_i32 = arith.constant 64 : i32
    %97 = tpu.dynamic_rotate %92 by %c64_i32 dim 1 : vector<2x128xf32>, i32 -> vector<2x128xf32>
    %c96_i32 = arith.constant 96 : i32
    %98 = tpu.dynamic_rotate %92 by %c96_i32 dim 1 : vector<2x128xf32>, i32 -> vector<2x128xf32>
    %c64_i32_42 = arith.constant 64 : i32
    %99 = tpu.dynamic_rotate %93 by %c64_i32_42 dim 1 : vector<2x256xf32>, i32 -> vector<2x256xf32>
    %c128_i32 = arith.constant 128 : i32
    %100 = tpu.dynamic_rotate %93 by %c128_i32 dim 1 : vector<2x256xf32>, i32 -> vector<2x256xf32>
    %c192_i32 = arith.constant 192 : i32
    %101 = tpu.dynamic_rotate %93 by %c192_i32 dim 1 : vector<2x256xf32>, i32 -> vector<2x256xf32>
    %102 = arith.mulf %91, %92 : vector<2x128xf32>
    %103 = arith.mulf %91, %96 : vector<2x128xf32>
    %104 = arith.mulf %91, %97 : vector<2x128xf32>
    %105 = arith.mulf %91, %98 : vector<2x128xf32>
    %106 = tpu.concatenate %102, %103, %104, %105 in 0 : vector<2x128xf32>, vector<2x128xf32>, vector<2x128xf32>, vector<2x128xf32> -> vector<8x128xf32>
    %c0_43 = arith.constant 0 : index
    %c0_44 = arith.constant 0 : index
    %107 = vector.load %arg15[%c0_43, %c0_44] : memref<128x8xf32, #tpu.memory_space<vmem>>, vector<128x8xf32>
    %cst_45 = arith.constant dense<0.000000e+00> : vector<8x8xf32>
    %108 = tpu.matmul %106, %107, %cst_45 {dimension_numbers = #tpu.dot_dimension_numbers<[1], [0], [0], [1], [0, 0, 1, 1], [], []>} : vector<8x128xf32>, vector<128x8xf32>, vector<8x8xf32> -> vector<8x8xf32>
    %cst_46 = arith.constant 2.500000e-01 : f32
    %109 = vector.broadcast %cst_46 : f32 to vector<8x8xf32>
    %110 = arith.mulf %108, %109 : vector<8x8xf32>
    %111 = vector.extract_strided_slice %110 {offsets = [0, 0], sizes = [2, 8], strides = [1, 1]} : vector<8x8xf32> to vector<2x8xf32>
    %112 = vector.extract_strided_slice %110 {offsets = [2, 0], sizes = [2, 8], strides = [1, 1]} : vector<8x8xf32> to vector<2x8xf32>
    %113 = vector.extract_strided_slice %110 {offsets = [4, 0], sizes = [2, 8], strides = [1, 1]} : vector<8x8xf32> to vector<2x8xf32>
    %114 = vector.extract_strided_slice %110 {offsets = [6, 0], sizes = [2, 8], strides = [1, 1]} : vector<8x8xf32> to vector<2x8xf32>
    %115 = arith.maximumf %111, %112 : vector<2x8xf32>
    %116 = arith.maximumf %115, %113 : vector<2x8xf32>
    %117 = arith.maximumf %116, %114 : vector<2x8xf32>
    %118 = arith.subf %111, %117 : vector<2x8xf32>
    %119 = math.exp %118 : vector<2x8xf32>
    %120 = arith.subf %112, %117 : vector<2x8xf32>
    %121 = math.exp %120 : vector<2x8xf32>
    %122 = arith.subf %113, %117 : vector<2x8xf32>
    %123 = math.exp %122 : vector<2x8xf32>
    %124 = arith.subf %114, %117 : vector<2x8xf32>
    %125 = math.exp %124 : vector<2x8xf32>
    %126 = arith.addf %119, %121 : vector<2x8xf32>
    %127 = arith.addf %126, %123 : vector<2x8xf32>
    %128 = arith.addf %127, %125 : vector<2x8xf32>
    %129 = tpu.reciprocal %128 {approx = true} : vector<2x8xf32> -> vector<2x8xf32>
    %130 = arith.mulf %95, %129 : vector<2x8xf32>
    %131 = arith.mulf %119, %130 : vector<2x8xf32>
    %132 = arith.mulf %121, %130 : vector<2x8xf32>
    %133 = arith.mulf %123, %130 : vector<2x8xf32>
    %134 = arith.mulf %125, %130 : vector<2x8xf32>
    %135 = tpu.concatenate %131, %132, %133, %134 in 0 : vector<2x8xf32>, vector<2x8xf32>, vector<2x8xf32>, vector<2x8xf32> -> vector<8x8xf32>
    %c0_47 = arith.constant 0 : index
    %c0_48 = arith.constant 0 : index
    %136 = vector.load %arg16[%c0_47, %c0_48] : memref<8x256xf32, #tpu.memory_space<vmem>>, vector<8x256xf32>
    %cst_49 = arith.constant dense<0.000000e+00> : vector<8x256xf32>
    %137 = tpu.matmul %135, %136, %cst_49 {dimension_numbers = #tpu.dot_dimension_numbers<[1], [0], [0], [1], [0, 0, 1, 1], [], []>} : vector<8x8xf32>, vector<8x256xf32>, vector<8x256xf32> -> vector<8x256xf32>
    %138 = vector.extract_strided_slice %137 {offsets = [0, 0], sizes = [2, 256], strides = [1, 1]} : vector<8x256xf32> to vector<2x256xf32>
    %139 = arith.mulf %138, %93 : vector<2x256xf32>
    %140 = vector.extract_strided_slice %137 {offsets = [2, 0], sizes = [2, 256], strides = [1, 1]} : vector<8x256xf32> to vector<2x256xf32>
    %141 = arith.mulf %140, %99 : vector<2x256xf32>
    %142 = arith.addf %139, %141 : vector<2x256xf32>
    %143 = vector.extract_strided_slice %137 {offsets = [4, 0], sizes = [2, 256], strides = [1, 1]} : vector<8x256xf32> to vector<2x256xf32>
    %144 = arith.mulf %143, %100 : vector<2x256xf32>
    %145 = arith.addf %142, %144 : vector<2x256xf32>
    %146 = vector.extract_strided_slice %137 {offsets = [6, 0], sizes = [2, 256], strides = [1, 1]} : vector<8x256xf32> to vector<2x256xf32>
    %147 = arith.mulf %146, %101 : vector<2x256xf32>
    %148 = arith.addf %145, %147 : vector<2x256xf32>
    %149 = arith.truncf %148 : vector<2x256xf32> to vector<2x256xbf16>
    %c0_50 = arith.constant 0 : index
    %c0_51 = arith.constant 0 : index
    %150 = vector.load %arg8[%c0_50, %c0_51] : memref<256x128xbf16, #tpu.memory_space<vmem>>, vector<256x128xbf16>
    %cst_52 = arith.constant dense<0.000000e+00> : vector<2x128xf32>
    %151 = tpu.matmul %149, %150, %cst_52 {dimension_numbers = #tpu.dot_dimension_numbers<[1], [0], [0], [1], [0, 0, 1, 1], [], []>} : vector<2x256xbf16>, vector<256x128xbf16>, vector<2x128xf32> -> vector<2x128xf32>
    %152 = arith.addf %151, %87 : vector<2x128xf32>
    %c0_53 = arith.constant 0 : index
    %c0_54 = arith.constant 0 : index
    %153 = vector.load %arg13[%c0_53, %c0_54] : memref<4x128xf32, #tpu.memory_space<vmem>>, vector<4x128xf32>
    %cst_55 = arith.constant dense<0.000000e+00> : vector<2x128xf32>
    %154 = tpu.matmul %39, %153, %cst_55 {dimension_numbers = #tpu.dot_dimension_numbers<[1], [0], [0], [1], [0, 0, 1, 1], [], []>} : vector<2x4xf32>, vector<4x128xf32>, vector<2x128xf32> -> vector<2x128xf32>
    %155 = arith.mulf %154, %152 : vector<2x128xf32>
    %cst_56 = arith.constant 1.000000e+00 : f32
    %156 = vector.broadcast %cst_56 : f32 to vector<2x128xf32>
    %157 = arith.subf %156, %154 : vector<2x128xf32>
    %158 = arith.mulf %157, %1 : vector<2x128xf32>
    %159 = arith.addf %155, %158 : vector<2x128xf32>
    %c0_57 = arith.constant 0 : index
    %c0_58 = arith.constant 0 : index
    %160 = vector.load %arg17[%c0_57, %c0_58] : memref<2x128xf32, #tpu.memory_space<vmem>>, vector<2x128xf32>
    tpu.vector_store %arg17[%c0_57, %c0_58], %159 {strides = array<i32>} : memref<2x128xf32, #tpu.memory_space<vmem>>, vector<2x128xf32>,
    %161 = arith.mulf %154, %85 : vector<2x128xf32>
    %cst_59 = arith.constant 1.000000e+00 : f32
    %162 = vector.broadcast %cst_59 : f32 to vector<2x128xf32>
    %163 = arith.subf %162, %154 : vector<2x128xf32>
    %164 = arith.mulf %163, %2 : vector<2x128xf32>
    %165 = arith.addf %161, %164 : vector<2x128xf32>
    %c0_60 = arith.constant 0 : index
    %c0_61 = arith.constant 0 : index
    %166 = vector.load %arg18[%c0_60, %c0_61] : memref<2x128xf32, #tpu.memory_space<vmem>>, vector<2x128xf32>
    tpu.vector_store %arg18[%c0_60, %c0_61], %165 {strides = array<i32>} : memref<2x128xf32, #tpu.memory_space<vmem>>, vector<2x128xf32>,
    %c0_62 = arith.constant 0 : index
    %c0_63 = arith.constant 0 : index
    %167 = vector.load %arg19[%c0_62, %c0_63] : memref<2x128xf32, #tpu.memory_space<vmem>>, vector<2x128xf32>
    tpu.vector_store %arg19[%c0_62, %c0_63], %154 {strides = array<i32>} : memref<2x128xf32, #tpu.memory_space<vmem>>, vector<2x128xf32>,
    return
  }
}

</mosaic_0001>

<llo_original>
// kernel: fn.1
$region0: #{fn.1}
  #allocation0 [shape = 'u32[]', space=smem, size = 0x4, offset = 0x4, fixed_abs, tag = 'smem constant byte address 0x4 - core index']
  #allocation1 [shape = 'u32[144,128]{1,0:T(1,128)}', space=vmem, size = 0x12000, scoped, tag = 'internal scratch']
  %s0 = inlined_call_operand.hbm [shape: f32[2,16], index: 0, kind: input, shape index: {}]
  %s1 = inlined_call_operand.vmem [shape: f32[2,128], index: 1, kind: input, shape index: {}]
  %s2 = inlined_call_operand.vmem [shape: f32[2,128], index: 2, kind: input, shape index: {}]
  %s3 = inlined_call_operand.vmem [shape: f32[16,128], index: 3, kind: input, shape index: {}]
  %s4 = inlined_call_operand.vmem [shape: bf16[16,256], index: 4, kind: input, shape index: {}]
  %s5 = inlined_call_operand.hbm [shape: f32[128,128], index: 5, kind: input, shape index: {}]
  %s6 = inlined_call_operand.hbm [shape: bf16[384,512], index: 6, kind: input, shape index: {}]
  %s7 = inlined_call_operand.vmem [shape: bf16[128,512], index: 7, kind: input, shape index: {}]
  %s8 = inlined_call_operand.hbm [shape: bf16[256,128], index: 8, kind: input, shape index: {}]
  %s9 = inlined_call_operand.vmem [shape: f32[1,128], index: 9, kind: input, shape index: {}]
  %s10 = inlined_call_operand.hbm [shape: f32[1,256], index: 10, kind: input, shape index: {}]
  %s11 = inlined_call_operand.vmem [shape: f32[128,4], index: 11, kind: input, shape index: {}]
  %s12 = inlined_call_operand.vmem [shape: f32[4,256], index: 12, kind: input, shape index: {}]
  %s13 = inlined_call_operand.vmem [shape: f32[4,128], index: 13, kind: input, shape index: {}]
  %s14 = inlined_call_operand.vmem [shape: f32[4,8], index: 14, kind: input, shape index: {}]
  %s15 = inlined_call_operand.vmem [shape: f32[128,8], index: 15, kind: input, shape index: {}]
  %s16 = inlined_call_operand.vmem [shape: f32[8,256], index: 16, kind: input, shape index: {}]
  %s17 = inlined_call_operand.vmem [shape: f32[2,128], index: 17, kind: output, shape index: {0}]
  %s18 = inlined_call_operand.vmem [shape: f32[2,128], index: 18, kind: output, shape index: {1}]
  %s19 = inlined_call_operand.vmem [shape: f32[2,128], index: 19, kind: output, shape index: {2}]
  %20 = xla_tuple %s17, %s18, %s19
  %s21 = sld [smem:[#allocation0]]
  $region114: #{fn.1} parent=0
    _
  %s23 = ssub.s32 1, %s21
  %s24 = scalar_select 0, %s23, %s21
  $region1: #{fn.1} parent=0
    #allocation2 [shape = 'u8[1024]{0}', space=vmem, size = 0x400, scoped, tag = 'input window, operand 0, single buffered']
    #allocation3 [shape = 's32[1]{0}', space=sflag, size = 0x4, scoped, tag = 'scoped memory for fn.1']
    #allocation4 [shape = 'u8[65536]{0}', space=vmem, size = 0x10000, scoped, tag = 'input window, operand 5, single buffered']
    #allocation5 [shape = 's32[1]{0}', space=sflag, size = 0x4, scoped, tag = 'scoped memory for fn.1']
    #allocation6 [shape = 'u8[393216]{0}', space=vmem, size = 0x60000, scoped, tag = 'input window, operand 6, single buffered']
    #allocation7 [shape = 'u8[65536]{0}', space=vmem, size = 0x10000, scoped, tag = 'input window, operand 8, single buffered']
    #allocation8 [shape = 's32[1]{0}', space=sflag, size = 0x4, scoped, tag = 'scoped memory for fn.1']
    #allocation9 [shape = 'u8[1024]{0}', space=vmem, size = 0x400, scoped, tag = 'input window, operand 10, single buffered']
    %25 = vsyncpa [#allocation3], 0
    %26 = vsyncpa [#allocation5], 0
    %27 = vsyncpa [#allocation8], 0
    // Predicated region
    $region2: #{fn.1} parent=1 // pred_check
      _
    $region3: #{fn.1} parent=1 // pred_check_branch
      %29 = sbr.rel (0) target = $region5
    $region4: #{fn.1} parent=1 // pred_region
      %s31 = ssub.s32 32, 32
      %32 = vsyncadd [#allocation3], %s31
      %s34 = sshll.u32 [#allocation2], 4
      %s35 = int_to_ptr.vmem [resolvable:$true] %s34
      %37 = dma.hbm_to_vmem [thread:$0]  %s0, 32, %s35, [#allocation3]
    $region5: #{fn.1} parent=1 // pred_fallthru
      _
    // Predicated region
    $region6: #{fn.1} parent=1 // pred_check
      _
    $region7: #{fn.1} parent=1 // pred_check_branch
      %39 = sbr.rel (0) target = $region9
    $region8: #{fn.1} parent=1 // pred_region
      _
    $region9: #{fn.1} parent=1 // pred_fallthru
      _
    // Predicated region
    $region10: #{fn.1} parent=1 // pred_check
      _
    $region11: #{fn.1} parent=1 // pred_check_branch
      %41 = sbr.rel (0) target = $region13
    $region12: #{fn.1} parent=1 // pred_region
      _
    $region13: #{fn.1} parent=1 // pred_fallthru
      _
    // Predicated region
    $region14: #{fn.1} parent=1 // pred_check
      _
    $region15: #{fn.1} parent=1 // pred_check_branch
      %43 = sbr.rel (0) target = $region17
    $region16: #{fn.1} parent=1 // pred_region
      _
    $region17: #{fn.1} parent=1 // pred_fallthru
      _
    // Predicated region
    $region18: #{fn.1} parent=1 // pred_check
      _
    $region19: #{fn.1} parent=1 // pred_check_branch
      %45 = sbr.rel (0) target = $region21
    $region20: #{fn.1} parent=1 // pred_region
      _
    $region21: #{fn.1} parent=1 // pred_fallthru
      _
    // Predicated region
    $region22: #{fn.1} parent=1 // pred_check
      _
    $region23: #{fn.1} parent=1 // pred_check_branch
      %47 = sbr.rel (0) target = $region25
    $region24: #{fn.1} parent=1 // pred_region
      %s49 = ssub.s32 2048, 2048
      %50 = vsyncadd [#allocation5], %s49
      %s51 = sshll.u32 [#allocation4], 4
      %s52 = int_to_ptr.vmem [resolvable:$true] %s51
      %57 = dma.hbm_to_vmem [thread:$0]  %s5, 2048, %s52, [#allocation5], 128, 128, 8
    $region25: #{fn.1} parent=1 // pred_fallthru
      _
    // Predicated region
    $region26: #{fn.1} parent=1 // pred_check
      _
    $region27: #{fn.1} parent=1 // pred_check_branch
      %59 = sbr.rel (0) target = $region29
    $region28: #{fn.1} parent=1 // pred_region
      %s61 = ssub.s32 12288, 12288
      %62 = vsyncadd [#allocation5], %s61
      %s63 = sshll.u32 [#allocation6], 4
      %s64 = int_to_ptr.vmem [resolvable:$true] %s63
      %69 = dma.hbm_to_vmem [thread:$0]  %s6, 12288, %s64, [#allocation5], 256, 256, 16
    $region29: #{fn.1} parent=1 // pred_fallthru
      _
    // Predicated region
    $region30: #{fn.1} parent=1 // pred_check
      _
    $region31: #{fn.1} parent=1 // pred_check_branch
      %71 = sbr.rel (0) target = $region33
    $region32: #{fn.1} parent=1 // pred_region
      _
    $region33: #{fn.1} parent=1 // pred_fallthru
      _
    // Predicated region
    $region34: #{fn.1} parent=1 // pred_check
      _
    $region35: #{fn.1} parent=1 // pred_check_branch
      %73 = sbr.rel (0) target = $region37
    $region36: #{fn.1} parent=1 // pred_region
      %s75 = ssub.s32 2048, 2048
      %76 = vsyncadd [#allocation8], %s75
      %s77 = sshll.u32 [#allocation7], 4
      %s78 = int_to_ptr.vmem [resolvable:$true] %s77
      %83 = dma.hbm_to_vmem [thread:$0]  %s8, 2048, %s78, [#allocation8], 64, 64, 4
    $region37: #{fn.1} parent=1 // pred_fallthru
      _
    // Predicated region
    $region38: #{fn.1} parent=1 // pred_check
      _
    $region39: #{fn.1} parent=1 // pred_check_branch
      %85 = sbr.rel (0) target = $region41
    $region40: #{fn.1} parent=1 // pred_region
      _
    $region41: #{fn.1} parent=1 // pred_fallthru
      _
    // Predicated region
    $region42: #{fn.1} parent=1 // pred_check
      _
    $region43: #{fn.1} parent=1 // pred_check_branch
      %87 = sbr.rel (0) target = $region45
    $region44: #{fn.1} parent=1 // pred_region
      %s89 = ssub.s32 32, 32
      %90 = vsyncadd [#allocation8], %s89
      %s92 = sshll.u32 [#allocation9], 4
      %s93 = int_to_ptr.vmem [resolvable:$true] %s92
      %95 = dma.hbm_to_vmem [thread:$0]  %s10, 32, %s93, [#allocation8]
    $region45: #{fn.1} parent=1 // pred_fallthru
      _
    // Predicated region
    $region46: #{fn.1} parent=1 // pred_check
      _
    $region47: #{fn.1} parent=1 // pred_check_branch
      %97 = sbr.rel (0) target = $region49
    $region48: #{fn.1} parent=1 // pred_region
      _
    $region49: #{fn.1} parent=1 // pred_fallthru
      _
    // Predicated region
    $region50: #{fn.1} parent=1 // pred_check
      _
    $region51: #{fn.1} parent=1 // pred_check_branch
      %99 = sbr.rel (0) target = $region53
    $region52: #{fn.1} parent=1 // pred_region
      _
    $region53: #{fn.1} parent=1 // pred_fallthru
      _
    // Predicated region
    $region54: #{fn.1} parent=1 // pred_check
      _
    $region55: #{fn.1} parent=1 // pred_check_branch
      %101 = sbr.rel (0) target = $region57
    $region56: #{fn.1} parent=1 // pred_region
      _
    $region57: #{fn.1} parent=1 // pred_fallthru
      _
    // Predicated region
    $region58: #{fn.1} parent=1 // pred_check
      _
    $region59: #{fn.1} parent=1 // pred_check_branch
      %103 = sbr.rel (0) target = $region61
    $region60: #{fn.1} parent=1 // pred_region
      _
    $region61: #{fn.1} parent=1 // pred_fallthru
      _
    // Predicated region
    $region62: #{fn.1} parent=1 // pred_check
      _
    $region63: #{fn.1} parent=1 // pred_check_branch
      %105 = sbr.rel (0) target = $region65
    $region64: #{fn.1} parent=1 // pred_region
      _
    $region65: #{fn.1} parent=1 // pred_fallthru
      _
    // Predicated region
    $region66: #{fn.1} parent=1 // pred_check
      _
    $region67: #{fn.1} parent=1 // pred_check_branch
      %107 = sbr.rel (0) target = $region69
    $region68: #{fn.1} parent=1 // pred_region
      _
    $region69: #{fn.1} parent=1 // pred_fallthru
      _
    // Predicated region
    $region70: #{fn.1} parent=1 // pred_check
      _
    $region71: #{fn.1} parent=1 // pred_check_branch
      %109 = sbr.rel (0) target = $region73
    $region72: #{fn.1} parent=1 // pred_region
      %110 = dma.done [#allocation3], 32
    $region73: #{fn.1} parent=1 // pred_fallthru
      _
    // Predicated region
    $region74: #{fn.1} parent=1 // pred_check
      _
    $region75: #{fn.1} parent=1 // pred_check_branch
      %112 = sbr.rel (0) target = $region77
    $region76: #{fn.1} parent=1 // pred_region
      %113 = dma.done [#allocation5], 2048
    $region77: #{fn.1} parent=1 // pred_fallthru
      _
    // Predicated region
    $region78: #{fn.1} parent=1 // pred_check
      _
    $region79: #{fn.1} parent=1 // pred_check_branch
      %115 = sbr.rel (0) target = $region81
    $region80: #{fn.1} parent=1 // pred_region
      %116 = dma.done [#allocation5], 12288
    $region81: #{fn.1} parent=1 // pred_fallthru
      _
    // Predicated region
    $region82: #{fn.1} parent=1 // pred_check
      _
    $region83: #{fn.1} parent=1 // pred_check_branch
      %118 = sbr.rel (0) target = $region85
    $region84: #{fn.1} parent=1 // pred_region
      %119 = dma.done [#allocation8], 2048
    $region85: #{fn.1} parent=1 // pred_fallthru
      _
    // Predicated region
    $region86: #{fn.1} parent=1 // pred_check
      _
    $region87: #{fn.1} parent=1 // pred_check_branch
      %121 = sbr.rel (0) target = $region89
    $region88: #{fn.1} parent=1 // pred_region
      %122 = dma.done [#allocation8], 32
    $region89: #{fn.1} parent=1 // pred_fallthru
      _
    %v124 = vld [vmem:[#allocation2] sm:$0x3]
    %v125 = vld [vmem:[%s1] sm:$0x3]
    %v126 = vld [vmem:[%s2] sm:$0x3]
    %v127 = vld [vmem:[%s9] sm:$0x1]
    %v128 = vld [vmem:[#allocation9] sm:$0x3]
    %v129 = vld [vmem:[%s3] sm:$0xff]
    %v130 = vld [vmem:[%s3 + $0x8] sm:$0xff]
    %v132 = vlaneseq
    %v133 = vshrl.u32 %v132, 7
    %v134 = vsub.s32 0, %v133
    %v135 = vrot.slane %v127, %v134
    %vm137 = vcmask 130048
    %v139 = vsel %vm137, %v124, 0
    %141 = vmatprep.subr.mxu0 0.0
    %142 = vmatpush1.msra.mxu0 %v129
    %143 = vmatprep.subr.mxu0 0.0
    %144 = vmatpush1.msra.mxu0 %v130
    %145 = vmatprep.subr.mxu0 0.0
    %146 = vmatpush1.msra.mxu0 0.0
    %147 = vmatprep.subr.mxu0 0.0
    %148 = vmatpush1.msra.mxu0 0.0
    %149 = vmatprep.subr.mxu0 0.0
    %150 = vmatpush1.msra.mxu0 0.0
    %151 = vmatprep.subr.mxu0 0.0
    %152 = vmatpush1.msra.mxu0 0.0
    %153 = vmatprep.subr.mxu0 0.0
    %154 = vmatpush1.msra.mxu0 0.0
    %155 = vmatprep.subr.mxu0 0.0
    %156 = vmatpush1.msra.mxu0 0.0
    %157 = vmatprep.subr.mxu0 0.0
    %158 = vmatpush1.msra.mxu0 0.0
    %159 = vmatprep.subr.mxu0 0.0
    %160 = vmatpush1.msra.mxu0 0.0
    %161 = vmatprep.subr.mxu0 0.0
    %162 = vmatpush1.msra.mxu0 0.0
    %163 = vmatprep.subr.mxu0 0.0
    %164 = vmatpush1.msra.mxu0 0.0
    %165 = vmatprep.subr.mxu0 0.0
    %166 = vmatpush1.msra.mxu0 0.0
    %167 = vmatprep.subr.mxu0 0.0
    %168 = vmatpush1.msra.mxu0 0.0
    %169 = vmatprep.subr.mxu0 0.0
    %170 = vmatpush1.msra.mxu0 0.0
    %171 = vmatprep.subr.mxu0 0.0
    %172 = vmatpush1.msra.mxu0 0.0
    %173 = vmatprep.subr.mxu0 0.0
    %174 = vmatpush1.msra.mxu0 0.0
    %175 = vmatprep.subr.mxu0 0.0
    %176 = vmatpush1.msra.mxu0 0.0
    %177 = vmatprep.subr.mxu0 0.0
    %178 = vmatpush1.msra.mxu0 0.0
    %179 = vmatprep.subr.mxu0 0.0
    %180 = vmatpush1.msra.mxu0 0.0
    %181 = vmatprep.subr.mxu0 0.0
    %182 = vmatpush1.msra.mxu0 0.0
    %183 = vmatprep.subr.mxu0 0.0
    %184 = vmatpush1.msra.mxu0 0.0
    %185 = vmatprep.subr.mxu0 0.0
    %186 = vmatpush1.msra.mxu0 0.0
    %187 = vmatprep.subr.mxu0 0.0
    %188 = vmatpush1.msra.mxu0 0.0
    %189 = vmatprep.subr.mxu0 0.0
    %190 = vmatpush1.msra.mxu0 0.0
    %191 = vmatprep.subr.mxu0 0.0
    %192 = vmatpush1.msra.mxu0 0.0
    %193 = vmatprep.subr.mxu0 0.0
    %194 = vmatpush1.msra.mxu0 0.0
    %195 = vmatprep.subr.mxu0 0.0
    %196 = vmatpush1.msra.mxu0 0.0
    %197 = vmatprep.subr.mxu0 0.0
    %198 = vmatpush1.msra.mxu0 0.0
    %199 = vmatprep.subr.mxu0 0.0
    %200 = vmatpush1.msra.mxu0 0.0
    %201 = vmatprep.subr.mxu0 0.0
    %202 = vmatpush1.msra.mxu0 0.0
    %203 = vmatprep.subr.mxu0 0.0
    %204 = vmatpush1.msra.mxu0 0.0
    %205 = vmatprep.mubr.f32.mxu0 0.0
    %206 = vmatmul.mubr.f32.gmra.mrb[0].mxu0 %v139
    %v207 = vpop.f32.mrb[0].mxu0
    %v208 = vadd.f32 %v135, %v207
    %v209 = vpop.f32.mrb[0].mxu0
    %210 = vdwg.mxu0
    %v211 = vpack.c.bf16 %v124, %v124
    %v212 = vld [vmem:[%s4] sm:$0xff]
    %v213 = vld [vmem:[%s4 + $0x8] sm:$0xff]
    %v215 = vlaneseq
    %v216 = vshrl.u32 %v215, 7
    %v217 = vsub.s32 0, %v216
    %v218 = vrot.slane %v128, %v217
    %v219 = vlaneseq
    %v220 = vshrl.u32 %v219, 7
    %v221 = vsub.s32 1, %v220
    %v222 = vrot.slane %v128, %v221
    %v227 = vunpack.c.l.b16 %v212
    %v228 = vunpack.c.h.b16 %v212
    %v229 = vunpack.c.l.b16 %v213
    %v230 = vunpack.c.h.b16 %v213
    %v231 = vpack.c.b16 %v229, %v227
    %v232 = vpack.c.b16 %v230, %v228
    %v236 = vsel %vm137, %v211, 0
    %238 = vmatprep.subr.bf16.mxu0 %v232
    %239 = vmatpush1.bf16.msra.mxu0 %v231
    %240 = vmatprep.subr.bf16.mxu0 0
    %241 = vmatpush1.bf16.msra.mxu0 0
    %242 = vmatprep.subr.bf16.mxu0 0
    %243 = vmatpush1.bf16.msra.mxu0 0
    %244 = vmatprep.subr.bf16.mxu0 0
    %245 = vmatpush1.bf16.msra.mxu0 0
    %246 = vmatprep.subr.bf16.mxu0 0
    %247 = vmatpush1.bf16.msra.mxu0 0
    %248 = vmatprep.subr.bf16.mxu0 0
    %249 = vmatpush1.bf16.msra.mxu0 0
    %250 = vmatprep.subr.bf16.mxu0 0
    %251 = vmatpush1.bf16.msra.mxu0 0
    %252 = vmatprep.subr.bf16.mxu0 0
    %253 = vmatpush1.bf16.msra.mxu0 0
    %254 = vmatprep.subr.bf16.mxu0 0
    %255 = vmatpush1.bf16.msra.mxu0 0
    %256 = vmatprep.subr.bf16.mxu0 0
    %257 = vmatpush1.bf16.msra.mxu0 0
    %258 = vmatprep.subr.bf16.mxu0 0
    %259 = vmatpush1.bf16.msra.mxu0 0
    %260 = vmatprep.subr.bf16.mxu0 0
    %261 = vmatpush1.bf16.msra.mxu0 0
    %262 = vmatprep.subr.bf16.mxu0 0
    %263 = vmatpush1.bf16.msra.mxu0 0
    %264 = vmatprep.subr.bf16.mxu0 0
    %265 = vmatpush1.bf16.msra.mxu0 0
    %266 = vmatprep.subr.bf16.mxu0 0
    %267 = vmatpush1.bf16.msra.mxu0 0
    %268 = vmatprep.subr.bf16.mxu0 0
    %269 = vmatpush1.bf16.msra.mxu0 0
    %270 = vmatprep.mubr.bf16.mxu0 0
    %271 = vmatmul.mubr.bf16.gmra.mrb[0].mxu0 %v236
    %v272 = vpop.f32.mrb[0].mxu0
    %v273 = vadd.f32 %v218, %v272
    %v274 = vpop.f32.mrb[0].mxu0
    %v275 = vadd.f32 %v222, %v274
    %v276 = vpop.f32.mrb[0].mxu0
    %v277 = vpop.f32.mrb[0].mxu0
    %278 = vdwg.mxu0
    %v279 = vld [vmem:[#allocation4] sm:$0xff]
    %v280 = vld [vmem:[#allocation4 + $0x8] sm:$0xff]
    %v281 = vld [vmem:[#allocation4 + $0x10] sm:$0xff]
    %v282 = vld [vmem:[#allocation4 + $0x18] sm:$0xff]
    %v283 = vld [vmem:[#allocation4 + $0x20] sm:$0xff]
    %v284 = vld [vmem:[#allocation4 + $0x28] sm:$0xff]
    %v285 = vld [vmem:[#allocation4 + $0x30] sm:$0xff]
    %v286 = vld [vmem:[#allocation4 + $0x38] sm:$0xff]
    %v287 = vld [vmem:[#allocation4 + $0x40] sm:$0xff]
    %v288 = vld [vmem:[#allocation4 + $0x48] sm:$0xff]
    %v289 = vld [vmem:[#allocation4 + $0x50] sm:$0xff]
    %v290 = vld [vmem:[#allocation4 + $0x58] sm:$0xff]
    %v291 = vld [vmem:[#allocation4 + $0x60] sm:$0xff]
    %v292 = vld [vmem:[#allocation4 + $0x68] sm:$0xff]
    %v293 = vld [vmem:[#allocation4 + $0x70] sm:$0xff]
    %v294 = vld [vmem:[#allocation4 + $0x78] sm:$0xff]
    %295 = vmatprep.subr.mxu0 0.0
    %296 = vmatpush1.msra.mxu0 %v279
    %297 = vmatprep.subr.mxu0 0.0
    %298 = vmatpush1.msra.mxu0 %v280
    %299 = vmatprep.subr.mxu0 0.0
    %300 = vmatpush1.msra.mxu0 %v281
    %301 = vmatprep.subr.mxu0 0.0
    %302 = vmatpush1.msra.mxu0 %v282
    %303 = vmatprep.subr.mxu0 0.0
    %304 = vmatpush1.msra.mxu0 %v283
    %305 = vmatprep.subr.mxu0 0.0
    %306 = vmatpush1.msra.mxu0 %v284
    %307 = vmatprep.subr.mxu0 0.0
    %308 = vmatpush1.msra.mxu0 %v285
    %309 = vmatprep.subr.mxu0 0.0
    %310 = vmatpush1.msra.mxu0 %v286
    %311 = vmatprep.subr.mxu0 0.0
    %312 = vmatpush1.msra.mxu0 %v287
    %313 = vmatprep.subr.mxu0 0.0
    %314 = vmatpush1.msra.mxu0 %v288
    %315 = vmatprep.subr.mxu0 0.0
    %316 = vmatpush1.msra.mxu0 %v289
    %317 = vmatprep.subr.mxu0 0.0
    %318 = vmatpush1.msra.mxu0 %v290
    %319 = vmatprep.subr.mxu0 0.0
    %320 = vmatpush1.msra.mxu0 %v291
    %321 = vmatprep.subr.mxu0 0.0
    %322 = vmatpush1.msra.mxu0 %v292
    %323 = vmatprep.subr.mxu0 0.0
    %324 = vmatpush1.msra.mxu0 %v293
    %325 = vmatprep.subr.mxu0 0.0
    %326 = vmatpush1.msra.mxu0 %v294
    %327 = vmatprep.subr.mxu0 0.0
    %328 = vmatpush1.msra.mxu0 0.0
    %329 = vmatprep.subr.mxu0 0.0
    %330 = vmatpush1.msra.mxu0 0.0
    %331 = vmatprep.subr.mxu0 0.0
    %332 = vmatpush1.msra.mxu0 0.0
    %333 = vmatprep.subr.mxu0 0.0
    %334 = vmatpush1.msra.mxu0 0.0
    %335 = vmatprep.subr.mxu0 0.0
    %336 = vmatpush1.msra.mxu0 0.0
    %337 = vmatprep.subr.mxu0 0.0
    %338 = vmatpush1.msra.mxu0 0.0
    %339 = vmatprep.subr.mxu0 0.0
    %340 = vmatpush1.msra.mxu0 0.0
    %341 = vmatprep.subr.mxu0 0.0
    %342 = vmatpush1.msra.mxu0 0.0
    %343 = vmatprep.subr.mxu0 0.0
    %344 = vmatpush1.msra.mxu0 0.0
    %345 = vmatprep.subr.mxu0 0.0
    %346 = vmatpush1.msra.mxu0 0.0
    %347 = vmatprep.subr.mxu0 0.0
    %348 = vmatpush1.msra.mxu0 0.0
    %349 = vmatprep.subr.mxu0 0.0
    %350 = vmatpush1.msra.mxu0 0.0
    %351 = vmatprep.subr.mxu0 0.0
    %352 = vmatpush1.msra.mxu0 0.0
    %353 = vmatprep.subr.mxu0 0.0
    %354 = vmatpush1.msra.mxu0 0.0
    %355 = vmatprep.subr.mxu0 0.0
    %356 = vmatpush1.msra.mxu0 0.0
    %357 = vmatprep.subr.mxu0 0.0
    %358 = vmatpush1.msra.mxu0 0.0
    %359 = vmatprep.mubr.f32.mxu0 0.0
    %360 = vmatmul.mubr.f32.gmra.mrb[0].mxu0 %v125
    %v361 = vpop.f32.mrb[0].mxu0
    %v362 = vadd.f32 0.0, %v361
    %v363 = vpop.f32.mrb[0].mxu0
    %364 = vdwg.mxu0
    %v365 = vmul.f32 %v362, %v208
    %v366 = vmul.f32 %v362, %v135
    %v368 = vrot.slane %v366, 6
    %vm370 = vcmask 1041408
    %v371 = vsel %vm370, %v365, %v368
    %v372 = vld [vmem:[%s11] sm:$0xff]
    %v373 = vld [vmem:[%s11 + $0x8] sm:$0xff]
    %v374 = vld [vmem:[%s11 + $0x10] sm:$0xff]
    %v375 = vld [vmem:[%s11 + $0x18] sm:$0xff]
    %v376 = vld [vmem:[%s11 + $0x20] sm:$0xff]
    %v377 = vld [vmem:[%s11 + $0x28] sm:$0xff]
    %v378 = vld [vmem:[%s11 + $0x30] sm:$0xff]
    %v379 = vld [vmem:[%s11 + $0x38] sm:$0xff]
    %v380 = vld [vmem:[%s11 + $0x40] sm:$0xff]
    %v381 = vld [vmem:[%s11 + $0x48] sm:$0xff]
    %v382 = vld [vmem:[%s11 + $0x50] sm:$0xff]
    %v383 = vld [vmem:[%s11 + $0x58] sm:$0xff]
    %v384 = vld [vmem:[%s11 + $0x60] sm:$0xff]
    %v385 = vld [vmem:[%s11 + $0x68] sm:$0xff]
    %v386 = vld [vmem:[%s11 + $0x70] sm:$0xff]
    %v387 = vld [vmem:[%s11 + $0x78] sm:$0xff]
    %388 = vmatprep.subr.mxu0 0.0
    %389 = vmatpush1.msra.mxu0 %v372
    %390 = vmatprep.subr.mxu0 0.0
    %391 = vmatpush1.msra.mxu0 %v373
    %392 = vmatprep.subr.mxu0 0.0
    %393 = vmatpush1.msra.mxu0 %v374
    %394 = vmatprep.subr.mxu0 0.0
    %395 = vmatpush1.msra.mxu0 %v375
    %396 = vmatprep.subr.mxu0 0.0
    %397 = vmatpush1.msra.mxu0 %v376
    %398 = vmatprep.subr.mxu0 0.0
    %399 = vmatpush1.msra.mxu0 %v377
    %400 = vmatprep.subr.mxu0 0.0
    %401 = vmatpush1.msra.mxu0 %v378
    %402 = vmatprep.subr.mxu0 0.0
    %403 = vmatpush1.msra.mxu0 %v379
    %404 = vmatprep.subr.mxu0 0.0
    %405 = vmatpush1.msra.mxu0 %v380
    %406 = vmatprep.subr.mxu0 0.0
    %407 = vmatpush1.msra.mxu0 %v381
    %408 = vmatprep.subr.mxu0 0.0
    %409 = vmatpush1.msra.mxu0 %v382
    %410 = vmatprep.subr.mxu0 0.0
    %411 = vmatpush1.msra.mxu0 %v383
    %412 = vmatprep.subr.mxu0 0.0
    %413 = vmatpush1.msra.mxu0 %v384
    %414 = vmatprep.subr.mxu0 0.0
    %415 = vmatpush1.msra.mxu0 %v385
    %416 = vmatprep.subr.mxu0 0.0
    %417 = vmatpush1.msra.mxu0 %v386
    %418 = vmatprep.subr.mxu0 0.0
    %419 = vmatpush1.msra.mxu0 %v387
    %420 = vmatprep.subr.mxu0 0.0
    %421 = vmatpush1.msra.mxu0 0.0
    %422 = vmatprep.subr.mxu0 0.0
    %423 = vmatpush1.msra.mxu0 0.0
    %424 = vmatprep.subr.mxu0 0.0
    %425 = vmatpush1.msra.mxu0 0.0
    %426 = vmatprep.subr.mxu0 0.0
    %427 = vmatpush1.msra.mxu0 0.0
    %428 = vmatprep.subr.mxu0 0.0
    %429 = vmatpush1.msra.mxu0 0.0
    %430 = vmatprep.subr.mxu0 0.0
    %431 = vmatpush1.msra.mxu0 0.0
    %432 = vmatprep.subr.mxu0 0.0
    %433 = vmatpush1.msra.mxu0 0.0
    %434 = vmatprep.subr.mxu0 0.0
    %435 = vmatpush1.msra.mxu0 0.0
    %436 = vmatprep.subr.mxu0 0.0
    %437 = vmatpush1.msra.mxu0 0.0
    %438 = vmatprep.subr.mxu0 0.0
    %439 = vmatpush1.msra.mxu0 0.0
    %440 = vmatprep.subr.mxu0 0.0
    %441 = vmatpush1.msra.mxu0 0.0
    %442 = vmatprep.subr.mxu0 0.0
    %443 = vmatpush1.msra.mxu0 0.0
    %444 = vmatprep.subr.mxu0 0.0
    %445 = vmatpush1.msra.mxu0 0.0
    %446 = vmatprep.subr.mxu0 0.0
    %447 = vmatpush1.msra.mxu0 0.0
    %448 = vmatprep.subr.mxu0 0.0
    %449 = vmatpush1.msra.mxu0 0.0
    %450 = vmatprep.subr.mxu0 0.0
    %451 = vmatpush1.msra.mxu0 0.0
    %452 = vmatprep.mubr.f32.mxu0 0.0
    %453 = vmatmul.mubr.f32.gmra.mrb[0].mxu0 %v371
    %v454 = vpop.f32.mrb[0].mxu0
    %v455 = vadd.f32 0.0, %v454
    %v456 = vpop.f32.mrb[0].mxu0
    %457 = vdwg.mxu0
    %v458 = vmul.f32 %v455, 0.17677669
    %v461 = vunpack.c.l.s4 1966171168
    %v462 = vunpack.c.0.s8 %v461
    %v463 = vlaneseq
    %v464 = vshrl.u32 %v463, 7
    %v465 = vsub.s32 %v462, %v464
    %v466 = vrot.slane %v458, %v465
    %v467 = vcombine.high %v466, %v466
    %v469 = vunpack.c.l.s4 1966171168
    %v470 = vunpack.c.0.s8 %v469
    %v471 = vlaneseq
    %v472 = vshrl.u32 %v471, 7
    %v473 = vsub.s32 %v470, %v472
    %v474 = vrot.slane %v466, %v473
    %v476 = vunpack.c.l.s4 1966171168
    %v477 = vunpack.c.0.s8 %v476
    %v478 = vlaneseq
    %v479 = vshrl.u32 %v478, 7
    %v480 = vsub.s32 %v477, %v479
    %v481 = vrot.slane %v467, %v480
    %v482 = vlaneseq
    %v483 = vshrl.u32 %v482, 7
    %v484 = vsub.s32 0, %v483
    %v485 = vrot.slane %v458, %v484
    %487 = vbcast.lane.b32.xlu0 %v485, 256
    %v488 = vpop.permute.xlu0 %487
    %v489 = vlaneseq
    %v490 = vshrl.u32 %v489, 7
    %v491 = vsub.s32 1, %v490
    %v492 = vrot.slane %v458, %v491
    %494 = vbcast.lane.b32.xlu0 %v492, 256
    %v495 = vpop.permute.xlu0 %494
    %v496 = vlaneseq
    %v497 = vshrl.u32 %v496, 7
    %v498 = vsub.s32 0, %v497
    %v499 = vrot.slane %v474, %v498
    %v500 = vlaneseq
    %v501 = vshrl.u32 %v500, 7
    %v502 = vsub.s32 0, %v501
    %v503 = vrot.slane %v481, %v502
    %vm506 = vcmp.gt.f32.partialorder %v499, %v488
    %vm507 = vcmp.gt.f32.partialorder %v503, %v495
    %v508 = vsel %vm506, 1.0, 0.0
    %v509 = vsel %vm507, 1.0, 0.0
    %vm510 = vcmask 27648
    %v511 = vsel %vm510, %v508, 0.0
    %512 = vadd.xlane.f32.xlu0 %v511
    %v513 = vpop.xlane.xlu0 %512
    %v514 = vsel %vm510, %v509, 0.0
    %515 = vadd.xlane.f32.xlu0 %v514
    %v516 = vpop.xlane.xlu0 %515
    %vm517 = vcmp.lt.f32.partialorder %v513, 2.0
    %vm518 = vcmp.lt.f32.partialorder %v516, 2.0
    %v519 = vsel %vm517, 1.0, 0.0
    %v520 = vsel %vm518, 1.0, 0.0
    %v521 = vrot.slane %v458, 2
    %v523 = vmax.f32 %v458, %v521
    %v524 = vsub.f32 %v458, %v523
    %v525 = vmul.f32 %v524, 1.442695
    %v526 = vpow.pop %v525
    %v528 = vrot.slane %v523, 6
    %v530 = vsub.f32 %v458, %v528
    %v531 = vmul.f32 %v530, 1.442695
    %v532 = vpow.pop %v531
    %v534 = vrot.slane %v532, 2
    %v536 = vadd.f32 %v526, %v534
    %v537 = vrcp.pop %v536
    %v539 = vlaneseq
    %v540 = vshrl.u32 %v539, 7
    %v541 = vsub.s32 0, %v540
    %v542 = vrot.slane %v537, %v541
    %544 = vbcast.lane.b32.xlu0 %v542, 256
    %v545 = vpop.permute.xlu0 %544
    %v546 = vlaneseq
    %v547 = vshrl.u32 %v546, 7
    %v548 = vsub.s32 1, %v547
    %v549 = vrot.slane %v537, %v548
    %551 = vbcast.lane.b32.xlu0 %v549, 256
    %v552 = vpop.permute.xlu0 %551
    %v555 = vmul.f32 %v519, %v545
    %v556 = vmul.f32 %v520, %v552
    %559 = vset.pattern.permute.xlu0 0
    %560 = vperm.xlu0 %559, %v555
    %v561 = vpop.permute.xlu0 %560
    %562 = vset.pattern.permute.xlu0 0
    %563 = vperm.xlu0 %562, %v556
    %v564 = vpop.permute.xlu0 %563
    %v565 = vlaneseq
    %v566 = vand.u32 %v565, 127
    %v567 = vlaneseq
    %v568 = vshrl.u32 %v567, 7
    %v569 = vsub.s32 %v566, %v568
    %v570 = vrot.slane %v561, %v569
    %v571 = vlaneseq
    %v572 = vshrl.u32 %v571, 7
    %v573 = vsub.s32 %v566, %v572
    %v574 = vrot.slane %v564, %v573
    %vm575 = vcmask 1041409
    %v576 = vsel %vm575, %v574, %v570
    %v578 = vmul.f32 %v526, %v576
    %vm579 = vcmask 1043459
    %v580 = vsel %vm579, %v574, %v570
    %v582 = vmul.f32 %v532, %v580
    %v583 = vsel %vm370, %v578, %v582
    %v584 = vld [vmem:[%s12] sm:$0xff]
    %v586 = vcombine.high %v584, %v584
    %vm587 = vcmask 31744
    %v589 = vsel %vm587, %v583, 0
    %vm591 = vcmask 1043456
    %v592 = vsel %vm591, %v584, 0
    %v594 = vsel %vm591, %v586, 0
    %596 = vmatprep.subr.mxu0 %v594
    %597 = vmatpush1.msra.mxu0 %v592
    %598 = vmatprep.subr.mxu0 0.0
    %599 = vmatpush1.msra.mxu0 0.0
    %600 = vmatprep.subr.mxu0 0.0
    %601 = vmatpush1.msra.mxu0 0.0
    %602 = vmatprep.subr.mxu0 0.0
    %603 = vmatpush1.msra.mxu0 0.0
    %604 = vmatprep.subr.mxu0 0.0
    %605 = vmatpush1.msra.mxu0 0.0
    %606 = vmatprep.subr.mxu0 0.0
    %607 = vmatpush1.msra.mxu0 0.0
    %608 = vmatprep.subr.mxu0 0.0
    %609 = vmatpush1.msra.mxu0 0.0
    %610 = vmatprep.subr.mxu0 0.0
    %611 = vmatpush1.msra.mxu0 0.0
    %612 = vmatprep.subr.mxu0 0.0
    %613 = vmatpush1.msra.mxu0 0.0
    %614 = vmatprep.subr.mxu0 0.0
    %615 = vmatpush1.msra.mxu0 0.0
    %616 = vmatprep.subr.mxu0 0.0
    %617 = vmatpush1.msra.mxu0 0.0
    %618 = vmatprep.subr.mxu0 0.0
    %619 = vmatpush1.msra.mxu0 0.0
    %620 = vmatprep.subr.mxu0 0.0
    %621 = vmatpush1.msra.mxu0 0.0
    %622 = vmatprep.subr.mxu0 0.0
    %623 = vmatpush1.msra.mxu0 0.0
    %624 = vmatprep.subr.mxu0 0.0
    %625 = vmatpush1.msra.mxu0 0.0
    %626 = vmatprep.subr.mxu0 0.0
    %627 = vmatpush1.msra.mxu0 0.0
    %628 = vmatprep.subr.mxu0 0.0
    %629 = vmatpush1.msra.mxu0 0.0
    %630 = vmatprep.subr.mxu0 0.0
    %631 = vmatpush1.msra.mxu0 0.0
    %632 = vmatprep.subr.mxu0 0.0
    %633 = vmatpush1.msra.mxu0 0.0
    %634 = vmatprep.subr.mxu0 0.0
    %635 = vmatpush1.msra.mxu0 0.0
    %636 = vmatprep.subr.mxu0 0.0
    %637 = vmatpush1.msra.mxu0 0.0
    %638 = vmatprep.subr.mxu0 0.0
    %639 = vmatpush1.msra.mxu0 0.0
    %640 = vmatprep.subr.mxu0 0.0
    %641 = vmatpush1.msra.mxu0 0.0
    %642 = vmatprep.subr.mxu0 0.0
    %643 = vmatpush1.msra.mxu0 0.0
    %644 = vmatprep.subr.mxu0 0.0
    %645 = vmatpush1.msra.mxu0 0.0
    %646 = vmatprep.subr.mxu0 0.0
    %647 = vmatpush1.msra.mxu0 0.0
    %648 = vmatprep.subr.mxu0 0.0
    %649 = vmatpush1.msra.mxu0 0.0
    %650 = vmatprep.subr.mxu0 0.0
    %651 = vmatpush1.msra.mxu0 0.0
    %652 = vmatprep.subr.mxu0 0.0
    %653 = vmatpush1.msra.mxu0 0.0
    %654 = vmatprep.subr.mxu0 0.0
    %655 = vmatpush1.msra.mxu0 0.0
    %656 = vmatprep.subr.mxu0 0.0
    %657 = vmatpush1.msra.mxu0 0.0
    %658 = vmatprep.subr.mxu0 0.0
    %659 = vmatpush1.msra.mxu0 0.0
    %660 = vmatprep.mubr.f32.mxu0 0.0
    %661 = vmatmul.mubr.f32.gmra.mrb[0].mxu0 %v589
    %v662 = vpop.f32.mrb[0].mxu0
    %v663 = vadd.f32 0.0, %v662
    %v664 = vpop.f32.mrb[0].mxu0
    %v665 = vadd.f32 0.0, %v664
    %666 = vdwg.mxu0
    %v667 = vmul.f32 %v663, %v273
    %v668 = vmul.f32 %v665, %v275
    %v669 = vmul.f32 %v663, %v218
    %v670 = vmul.f32 %v665, %v222
    %v673 = vrot.slane %v669, 2
    %v674 = vrot.slane %v670, 2
    %v677 = vadd.f32 %v667, %v673
    %v678 = vadd.f32 %v668, %v674
    %v679 = vpack.c.bf16 %v677, %v677
    %v680 = vpack.c.bf16 %v678, %v678
    %v681 = vpack.c.bf16 %v125, %v125
    %v682 = vld [vmem:[#allocation6] sm:$0xff]
    %v683 = vld [vmem:[#allocation6 + $0x8] sm:$0xff]
    %v684 = vld [vmem:[#allocation6 + $0x10] sm:$0xff]
    %v685 = vld [vmem:[#allocation6 + $0x18] sm:$0xff]
    %v686 = vld [vmem:[#allocation6 + $0x20] sm:$0xff]
    %v687 = vld [vmem:[#allocation6 + $0x28] sm:$0xff]
    %v688 = vld [vmem:[#allocation6 + $0x30] sm:$0xff]
    %v689 = vld [vmem:[#allocation6 + $0x38] sm:$0xff]
    %v690 = vld [vmem:[#allocation6 + $0x40] sm:$0xff]
    %v691 = vld [vmem:[#allocation6 + $0x48] sm:$0xff]
    %v692 = vld [vmem:[#allocation6 + $0x50] sm:$0xff]
    %v693 = vld [vmem:[#allocation6 + $0x58] sm:$0xff]
    %v694 = vld [vmem:[#allocation6 + $0x60] sm:$0xff]
    %v695 = vld [vmem:[#allocation6 + $0x68] sm:$0xff]
    %v696 = vld [vmem:[#allocation6 + $0x70] sm:$0xff]
    %v697 = vld [vmem:[#allocation6 + $0x78] sm:$0xff]
    %v698 = vld [vmem:[#allocation6 + $0x80] sm:$0xff]
    %v699 = vld [vmem:[#allocation6 + $0x88] sm:$0xff]
    %v700 = vld [vmem:[#allocation6 + $0x90] sm:$0xff]
    %v701 = vld [vmem:[#allocation6 + $0x98] sm:$0xff]
    %v702 = vld [vmem:[#allocation6 + $0xa0] sm:$0xff]
    %v703 = vld [vmem:[#allocation6 + $0xa8] sm:$0xff]
    %v704 = vld [vmem:[#allocation6 + $0xb0] sm:$0xff]
    %v705 = vld [vmem:[#allocation6 + $0xb8] sm:$0xff]
    %v706 = vld [vmem:[#allocation6 + $0xc0] sm:$0xff]
    %v707 = vld [vmem:[#allocation6 + $0xc8] sm:$0xff]
    %v708 = vld [vmem:[#allocation6 + $0xd0] sm:$0xff]
    %v709 = vld [vmem:[#allocation6 + $0xd8] sm:$0xff]
    %v710 = vld [vmem:[#allocation6 + $0xe0] sm:$0xff]
    %v711 = vld [vmem:[#allocation6 + $0xe8] sm:$0xff]
    %v712 = vld [vmem:[#allocation6 + $0xf0] sm:$0xff]
    %v713 = vld [vmem:[#allocation6 + $0xf8] sm:$0xff]
    %v714 = vld [vmem:[#allocation6 + $0x100] sm:$0xff]
    %v715 = vld [vmem:[#allocation6 + $0x108] sm:$0xff]
    %v716 = vld [vmem:[#allocation6 + $0x110] sm:$0xff]
    %v717 = vld [vmem:[#allocation6 + $0x118] sm:$0xff]
    %v718 = vld [vmem:[#allocation6 + $0x120] sm:$0xff]
    %v719 = vld [vmem:[#allocation6 + $0x128] sm:$0xff]
    %v720 = vld [vmem:[#allocation6 + $0x130] sm:$0xff]
    %v721 = vld [vmem:[#allocation6 + $0x138] sm:$0xff]
    %v722 = vld [vmem:[#allocation6 + $0x140] sm:$0xff]
    %v723 = vld [vmem:[#allocation6 + $0x148] sm:$0xff]
    %v724 = vld [vmem:[#allocation6 + $0x150] sm:$0xff]
    %v725 = vld [vmem:[#allocation6 + $0x158] sm:$0xff]
    %v726 = vld [vmem:[#allocation6 + $0x160] sm:$0xff]
    %v727 = vld [vmem:[#allocation6 + $0x168] sm:$0xff]
    %v728 = vld [vmem:[#allocation6 + $0x170] sm:$0xff]
    %v729 = vld [vmem:[#allocation6 + $0x178] sm:$0xff]
    %v730 = vld [vmem:[#allocation6 + $0x180] sm:$0xff]
    %v731 = vld [vmem:[#allocation6 + $0x188] sm:$0xff]
    %v732 = vld [vmem:[#allocation6 + $0x190] sm:$0xff]
    %v733 = vld [vmem:[#allocation6 + $0x198] sm:$0xff]
    %v734 = vld [vmem:[#allocation6 + $0x1a0] sm:$0xff]
    %v735 = vld [vmem:[#allocation6 + $0x1a8] sm:$0xff]
    %v736 = vld [vmem:[#allocation6 + $0x1b0] sm:$0xff]
    %v737 = vld [vmem:[#allocation6 + $0x1b8] sm:$0xff]
    %v738 = vld [vmem:[#allocation6 + $0x1c0] sm:$0xff]
    %v739 = vld [vmem:[#allocation6 + $0x1c8] sm:$0xff]
    %v740 = vld [vmem:[#allocation6 + $0x1d0] sm:$0xff]
    %v741 = vld [vmem:[#allocation6 + $0x1d8] sm:$0xff]
    %v742 = vld [vmem:[#allocation6 + $0x1e0] sm:$0xff]
    %v743 = vld [vmem:[#allocation6 + $0x1e8] sm:$0xff]
    %v744 = vld [vmem:[#allocation6 + $0x1f0] sm:$0xff]
    %v745 = vld [vmem:[#allocation6 + $0x1f8] sm:$0xff]
    %v746 = vld [vmem:[#allocation6 + $0x200] sm:$0xff]
    %v747 = vld [vmem:[#allocation6 + $0x208] sm:$0xff]
    %v748 = vld [vmem:[#allocation6 + $0x210] sm:$0xff]
    %v749 = vld [vmem:[#allocation6 + $0x218] sm:$0xff]
    %v750 = vld [vmem:[#allocation6 + $0x220] sm:$0xff]
    %v751 = vld [vmem:[#allocation6 + $0x228] sm:$0xff]
    %v752 = vld [vmem:[#allocation6 + $0x230] sm:$0xff]
    %v753 = vld [vmem:[#allocation6 + $0x238] sm:$0xff]
    %v754 = vld [vmem:[#allocation6 + $0x240] sm:$0xff]
    %v755 = vld [vmem:[#allocation6 + $0x248] sm:$0xff]
    %v756 = vld [vmem:[#allocation6 + $0x250] sm:$0xff]
    %v757 = vld [vmem:[#allocation6 + $0x258] sm:$0xff]
    %v758 = vld [vmem:[#allocation6 + $0x260] sm:$0xff]
    %v759 = vld [vmem:[#allocation6 + $0x268] sm:$0xff]
    %v760 = vld [vmem:[#allocation6 + $0x270] sm:$0xff]
    %v761 = vld [vmem:[#allocation6 + $0x278] sm:$0xff]
    %v762 = vld [vmem:[#allocation6 + $0x280] sm:$0xff]
    %v763 = vld [vmem:[#allocation6 + $0x288] sm:$0xff]
    %v764 = vld [vmem:[#allocation6 + $0x290] sm:$0xff]
    %v765 = vld [vmem:[#allocation6 + $0x298] sm:$0xff]
    %v766 = vld [vmem:[#allocation6 + $0x2a0] sm:$0xff]
    %v767 = vld [vmem:[#allocation6 + $0x2a8] sm:$0xff]
    %v768 = vld [vmem:[#allocation6 + $0x2b0] sm:$0xff]
    %v769 = vld [vmem:[#allocation6 + $0x2b8] sm:$0xff]
    %v770 = vld [vmem:[#allocation6 + $0x2c0] sm:$0xff]
    %v771 = vld [vmem:[#allocation6 + $0x2c8] sm:$0xff]
    %v772 = vld [vmem:[#allocation6 + $0x2d0] sm:$0xff]
    %v773 = vld [vmem:[#allocation6 + $0x2d8] sm:$0xff]
    %v774 = vld [vmem:[#allocation6 + $0x2e0] sm:$0xff]
    %v775 = vld [vmem:[#allocation6 + $0x2e8] sm:$0xff]
    %v776 = vld [vmem:[#allocation6 + $0x2f0] sm:$0xff]
    %v777 = vld [vmem:[#allocation6 + $0x2f8] sm:$0xff]
    %v874 = vunpack.c.l.b16 %v682
    %v875 = vunpack.c.h.b16 %v682
    %v876 = vunpack.c.l.b16 %v683
    %v877 = vunpack.c.h.b16 %v683
    %v878 = vunpack.c.l.b16 %v684
    %v879 = vunpack.c.h.b16 %v684
    %v880 = vunpack.c.l.b16 %v685
    %v881 = vunpack.c.h.b16 %v685
    %v882 = vunpack.c.l.b16 %v686
    %v883 = vunpack.c.h.b16 %v686
    %v884 = vunpack.c.l.b16 %v687
    %v885 = vunpack.c.h.b16 %v687
    %v886 = vunpack.c.l.b16 %v688
    %v887 = vunpack.c.h.b16 %v688
    %v888 = vunpack.c.l.b16 %v689
    %v889 = vunpack.c.h.b16 %v689
    %v890 = vunpack.c.l.b16 %v690
    %v891 = vunpack.c.h.b16 %v690
    %v892 = vunpack.c.l.b16 %v691
    %v893 = vunpack.c.h.b16 %v691
    %v894 = vunpack.c.l.b16 %v692
    %v895 = vunpack.c.h.b16 %v692
    %v896 = vunpack.c.l.b16 %v693
    %v897 = vunpack.c.h.b16 %v693
    %v898 = vunpack.c.l.b16 %v694
    %v899 = vunpack.c.h.b16 %v694
    %v900 = vunpack.c.l.b16 %v695
    %v901 = vunpack.c.h.b16 %v695
    %v902 = vunpack.c.l.b16 %v696
    %v903 = vunpack.c.h.b16 %v696
    %v904 = vunpack.c.l.b16 %v697
    %v905 = vunpack.c.h.b16 %v697
    %v906 = vunpack.c.l.b16 %v698
    %v907 = vunpack.c.h.b16 %v698
    %v908 = vunpack.c.l.b16 %v699
    %v909 = vunpack.c.h.b16 %v699
    %v910 = vunpack.c.l.b16 %v700
    %v911 = vunpack.c.h.b16 %v700
    %v912 = vunpack.c.l.b16 %v701
    %v913 = vunpack.c.h.b16 %v701
    %v914 = vunpack.c.l.b16 %v702
    %v915 = vunpack.c.h.b16 %v702
    %v916 = vunpack.c.l.b16 %v703
    %v917 = vunpack.c.h.b16 %v703
    %v918 = vunpack.c.l.b16 %v704
    %v919 = vunpack.c.h.b16 %v704
    %v920 = vunpack.c.l.b16 %v705
    %v921 = vunpack.c.h.b16 %v705
    %v922 = vunpack.c.l.b16 %v706
    %v923 = vunpack.c.h.b16 %v706
    %v924 = vunpack.c.l.b16 %v707
    %v925 = vunpack.c.h.b16 %v707
    %v926 = vunpack.c.l.b16 %v708
    %v927 = vunpack.c.h.b16 %v708
    %v928 = vunpack.c.l.b16 %v709
    %v929 = vunpack.c.h.b16 %v709
    %v930 = vunpack.c.l.b16 %v710
    %v931 = vunpack.c.h.b16 %v710
    %v932 = vunpack.c.l.b16 %v711
    %v933 = vunpack.c.h.b16 %v711
    %v934 = vunpack.c.l.b16 %v712
    %v935 = vunpack.c.h.b16 %v712
    %v936 = vunpack.c.l.b16 %v713
    %v937 = vunpack.c.h.b16 %v713
    %v938 = vunpack.c.l.b16 %v714
    %v939 = vunpack.c.h.b16 %v714
    %v940 = vunpack.c.l.b16 %v715
    %v941 = vunpack.c.h.b16 %v715
    %v942 = vunpack.c.l.b16 %v716
    %v943 = vunpack.c.h.b16 %v716
    %v944 = vunpack.c.l.b16 %v717
    %v945 = vunpack.c.h.b16 %v717
    %v946 = vunpack.c.l.b16 %v718
    %v947 = vunpack.c.h.b16 %v718
    %v948 = vunpack.c.l.b16 %v719
    %v949 = vunpack.c.h.b16 %v719
    %v950 = vunpack.c.l.b16 %v720
    %v951 = vunpack.c.h.b16 %v720
    %v952 = vunpack.c.l.b16 %v721
    %v953 = vunpack.c.h.b16 %v721
    %v954 = vunpack.c.l.b16 %v722
    %v955 = vunpack.c.h.b16 %v722
    %v956 = vunpack.c.l.b16 %v723
    %v957 = vunpack.c.h.b16 %v723
    %v958 = vunpack.c.l.b16 %v724
    %v959 = vunpack.c.h.b16 %v724
    %v960 = vunpack.c.l.b16 %v725
    %v961 = vunpack.c.h.b16 %v725
    %v962 = vunpack.c.l.b16 %v726
    %v963 = vunpack.c.h.b16 %v726
    %v964 = vunpack.c.l.b16 %v727
    %v965 = vunpack.c.h.b16 %v727
    %v966 = vunpack.c.l.b16 %v728
    %v967 = vunpack.c.h.b16 %v728
    %v968 = vunpack.c.l.b16 %v729
    %v969 = vunpack.c.h.b16 %v729
    %v970 = vunpack.c.l.b16 %v730
    %v971 = vunpack.c.h.b16 %v730
    %v972 = vunpack.c.l.b16 %v731
    %v973 = vunpack.c.h.b16 %v731
    %v974 = vunpack.c.l.b16 %v732
    %v975 = vunpack.c.h.b16 %v732
    %v976 = vunpack.c.l.b16 %v733
    %v977 = vunpack.c.h.b16 %v733
    %v978 = vunpack.c.l.b16 %v734
    %v979 = vunpack.c.h.b16 %v734
    %v980 = vunpack.c.l.b16 %v735
    %v981 = vunpack.c.h.b16 %v735
    %v982 = vunpack.c.l.b16 %v736
    %v983 = vunpack.c.h.b16 %v736
    %v984 = vunpack.c.l.b16 %v737
    %v985 = vunpack.c.h.b16 %v737
    %v986 = vunpack.c.l.b16 %v738
    %v987 = vunpack.c.h.b16 %v738
    %v988 = vunpack.c.l.b16 %v739
    %v989 = vunpack.c.h.b16 %v739
    %v990 = vunpack.c.l.b16 %v740
    %v991 = vunpack.c.h.b16 %v740
    %v992 = vunpack.c.l.b16 %v741
    %v993 = vunpack.c.h.b16 %v741
    %v994 = vunpack.c.l.b16 %v742
    %v995 = vunpack.c.h.b16 %v742
    %v996 = vunpack.c.l.b16 %v743
    %v997 = vunpack.c.h.b16 %v743
    %v998 = vunpack.c.l.b16 %v744
    %v999 = vunpack.c.h.b16 %v744
    %v1000 = vunpack.c.l.b16 %v745
    %v1001 = vunpack.c.h.b16 %v745
    %v1002 = vunpack.c.l.b16 %v746
    %v1003 = vunpack.c.h.b16 %v746
    %v1004 = vunpack.c.l.b16 %v747
    %v1005 = vunpack.c.h.b16 %v747
    %v1006 = vunpack.c.l.b16 %v748
    %v1007 = vunpack.c.h.b16 %v748
    %v1008 = vunpack.c.l.b16 %v749
    %v1009 = vunpack.c.h.b16 %v749
    %v1010 = vunpack.c.l.b16 %v750
    %v1011 = vunpack.c.h.b16 %v750
    %v1012 = vunpack.c.l.b16 %v751
    %v1013 = vunpack.c.h.b16 %v751
    %v1014 = vunpack.c.l.b16 %v752
    %v1015 = vunpack.c.h.b16 %v752
    %v1016 = vunpack.c.l.b16 %v753
    %v1017 = vunpack.c.h.b16 %v753
    %v1018 = vunpack.c.l.b16 %v754
    %v1019 = vunpack.c.h.b16 %v754
    %v1020 = vunpack.c.l.b16 %v755
    %v1021 = vunpack.c.h.b16 %v755
    %v1022 = vunpack.c.l.b16 %v756
    %v1023 = vunpack.c.h.b16 %v756
    %v1024 = vunpack.c.l.b16 %v757
    %v1025 = vunpack.c.h.b16 %v757
    %v1026 = vunpack.c.l.b16 %v758
    %v1027 = vunpack.c.h.b16 %v758
    %v1028 = vunpack.c.l.b16 %v759
    %v1029 = vunpack.c.h.b16 %v759
    %v1030 = vunpack.c.l.b16 %v760
    %v1031 = vunpack.c.h.b16 %v760
    %v1032 = vunpack.c.l.b16 %v761
    %v1033 = vunpack.c.h.b16 %v761
    %v1034 = vunpack.c.l.b16 %v762
    %v1035 = vunpack.c.h.b16 %v762
    %v1036 = vunpack.c.l.b16 %v763
    %v1037 = vunpack.c.h.b16 %v763
    %v1038 = vunpack.c.l.b16 %v764
    %v1039 = vunpack.c.h.b16 %v764
    %v1040 = vunpack.c.l.b16 %v765
    %v1041 = vunpack.c.h.b16 %v765
    %v1042 = vunpack.c.l.b16 %v766
    %v1043 = vunpack.c.h.b16 %v766
    %v1044 = vunpack.c.l.b16 %v767
    %v1045 = vunpack.c.h.b16 %v767
    %v1046 = vunpack.c.l.b16 %v768
    %v1047 = vunpack.c.h.b16 %v768
    %v1048 = vunpack.c.l.b16 %v769
    %v1049 = vunpack.c.h.b16 %v769
    %v1050 = vunpack.c.l.b16 %v770
    %v1051 = vunpack.c.h.b16 %v770
    %v1052 = vunpack.c.l.b16 %v771
    %v1053 = vunpack.c.h.b16 %v771
    %v1054 = vunpack.c.l.b16 %v772
    %v1055 = vunpack.c.h.b16 %v772
    %v1056 = vunpack.c.l.b16 %v773
    %v1057 = vunpack.c.h.b16 %v773
    %v1058 = vunpack.c.l.b16 %v774
    %v1059 = vunpack.c.h.b16 %v774
    %v1060 = vunpack.c.l.b16 %v775
    %v1061 = vunpack.c.h.b16 %v775
    %v1062 = vunpack.c.l.b16 %v776
    %v1063 = vunpack.c.h.b16 %v776
    %v1064 = vunpack.c.l.b16 %v777
    %v1065 = vunpack.c.h.b16 %v777
    %v1066 = vpack.c.b16 %v878, %v874
    %v1067 = vpack.c.b16 %v879, %v875
    %v1068 = vpack.c.b16 %v880, %v876
    %v1069 = vpack.c.b16 %v881, %v877
    %v1070 = vpack.c.b16 %v886, %v882
    %v1071 = vpack.c.b16 %v887, %v883
    %v1072 = vpack.c.b16 %v888, %v884
    %v1073 = vpack.c.b16 %v889, %v885
    %v1074 = vpack.c.b16 %v894, %v890
    %v1075 = vpack.c.b16 %v895, %v891
    %v1076 = vpack.c.b16 %v896, %v892
    %v1077 = vpack.c.b16 %v897, %v893
    %v1078 = vpack.c.b16 %v902, %v898
    %v1079 = vpack.c.b16 %v903, %v899
    %v1080 = vpack.c.b16 %v904, %v900
    %v1081 = vpack.c.b16 %v905, %v901
    %v1082 = vpack.c.b16 %v910, %v906
    %v1083 = vpack.c.b16 %v911, %v907
    %v1084 = vpack.c.b16 %v912, %v908
    %v1085 = vpack.c.b16 %v913, %v909
    %v1086 = vpack.c.b16 %v918, %v914
    %v1087 = vpack.c.b16 %v919, %v915
    %v1088 = vpack.c.b16 %v920, %v916
    %v1089 = vpack.c.b16 %v921, %v917
    %v1090 = vpack.c.b16 %v926, %v922
    %v1091 = vpack.c.b16 %v927, %v923
    %v1092 = vpack.c.b16 %v928, %v924
    %v1093 = vpack.c.b16 %v929, %v925
    %v1094 = vpack.c.b16 %v934, %v930
    %v1095 = vpack.c.b16 %v935, %v931
    %v1096 = vpack.c.b16 %v936, %v932
    %v1097 = vpack.c.b16 %v937, %v933
    %v1098 = vpack.c.b16 %v942, %v938
    %v1099 = vpack.c.b16 %v943, %v939
    %v1100 = vpack.c.b16 %v944, %v940
    %v1101 = vpack.c.b16 %v945, %v941
    %v1102 = vpack.c.b16 %v950, %v946
    %v1103 = vpack.c.b16 %v951, %v947
    %v1104 = vpack.c.b16 %v952, %v948
    %v1105 = vpack.c.b16 %v953, %v949
    %v1106 = vpack.c.b16 %v958, %v954
    %v1107 = vpack.c.b16 %v959, %v955
    %v1108 = vpack.c.b16 %v960, %v956
    %v1109 = vpack.c.b16 %v961, %v957
    %v1110 = vpack.c.b16 %v966, %v962
    %v1111 = vpack.c.b16 %v967, %v963
    %v1112 = vpack.c.b16 %v968, %v964
    %v1113 = vpack.c.b16 %v969, %v965
    %v1114 = vpack.c.b16 %v974, %v970
    %v1115 = vpack.c.b16 %v975, %v971
    %v1116 = vpack.c.b16 %v976, %v972
    %v1117 = vpack.c.b16 %v977, %v973
    %v1118 = vpack.c.b16 %v982, %v978
    %v1119 = vpack.c.b16 %v983, %v979
    %v1120 = vpack.c.b16 %v984, %v980
    %v1121 = vpack.c.b16 %v985, %v981
    %v1122 = vpack.c.b16 %v990, %v986
    %v1123 = vpack.c.b16 %v991, %v987
    %v1124 = vpack.c.b16 %v992, %v988
    %v1125 = vpack.c.b16 %v993, %v989
    %v1126 = vpack.c.b16 %v998, %v994
    %v1127 = vpack.c.b16 %v999, %v995
    %v1128 = vpack.c.b16 %v1000, %v996
    %v1129 = vpack.c.b16 %v1001, %v997
    %v1130 = vpack.c.b16 %v1006, %v1002
    %v1131 = vpack.c.b16 %v1007, %v1003
    %v1132 = vpack.c.b16 %v1008, %v1004
    %v1133 = vpack.c.b16 %v1009, %v1005
    %v1134 = vpack.c.b16 %v1014, %v1010
    %v1135 = vpack.c.b16 %v1015, %v1011
    %v1136 = vpack.c.b16 %v1016, %v1012
    %v1137 = vpack.c.b16 %v1017, %v1013
    %v1138 = vpack.c.b16 %v1022, %v1018
    %v1139 = vpack.c.b16 %v1023, %v1019
    %v1140 = vpack.c.b16 %v1024, %v1020
    %v1141 = vpack.c.b16 %v1025, %v1021
    %v1142 = vpack.c.b16 %v1030, %v1026
    %v1143 = vpack.c.b16 %v1031, %v1027
    %v1144 = vpack.c.b16 %v1032, %v1028
    %v1145 = vpack.c.b16 %v1033, %v1029
    %v1146 = vpack.c.b16 %v1038, %v1034
    %v1147 = vpack.c.b16 %v1039, %v1035
    %v1148 = vpack.c.b16 %v1040, %v1036
    %v1149 = vpack.c.b16 %v1041, %v1037
    %v1150 = vpack.c.b16 %v1046, %v1042
    %v1151 = vpack.c.b16 %v1047, %v1043
    %v1152 = vpack.c.b16 %v1048, %v1044
    %v1153 = vpack.c.b16 %v1049, %v1045
    %v1154 = vpack.c.b16 %v1054, %v1050
    %v1155 = vpack.c.b16 %v1055, %v1051
    %v1156 = vpack.c.b16 %v1056, %v1052
    %v1157 = vpack.c.b16 %v1057, %v1053
    %v1158 = vpack.c.b16 %v1062, %v1058
    %v1159 = vpack.c.b16 %v1063, %v1059
    %v1160 = vpack.c.b16 %v1064, %v1060
    %v1161 = vpack.c.b16 %v1065, %v1061
    %1258 = vmatprep.subr.bf16.mxu0 %v1067
    %1259 = vmatpush1.bf16.msra.mxu0 %v1066
    %1260 = vmatprep.subr.bf16.mxu0 %v1071
    %1261 = vmatpush1.bf16.msra.mxu0 %v1070
    %1262 = vmatprep.subr.bf16.mxu0 %v1075
    %1263 = vmatpush1.bf16.msra.mxu0 %v1074
    %1264 = vmatprep.subr.bf16.mxu0 %v1079
    %1265 = vmatpush1.bf16.msra.mxu0 %v1078
    %1266 = vmatprep.subr.bf16.mxu0 %v1083
    %1267 = vmatpush1.bf16.msra.mxu0 %v1082
    %1268 = vmatprep.subr.bf16.mxu0 %v1087
    %1269 = vmatpush1.bf16.msra.mxu0 %v1086
    %1270 = vmatprep.subr.bf16.mxu0 %v1091
    %1271 = vmatpush1.bf16.msra.mxu0 %v1090
    %1272 = vmatprep.subr.bf16.mxu0 %v1095
    %1273 = vmatpush1.bf16.msra.mxu0 %v1094
    %1274 = vmatprep.subr.bf16.mxu0 %v1099
    %1275 = vmatpush1.bf16.msra.mxu0 %v1098
    %1276 = vmatprep.subr.bf16.mxu0 %v1103
    %1277 = vmatpush1.bf16.msra.mxu0 %v1102
    %1278 = vmatprep.subr.bf16.mxu0 %v1107
    %1279 = vmatpush1.bf16.msra.mxu0 %v1106
    %1280 = vmatprep.subr.bf16.mxu0 %v1111
    %1281 = vmatpush1.bf16.msra.mxu0 %v1110
    %1282 = vmatprep.subr.bf16.mxu0 %v1115
    %1283 = vmatpush1.bf16.msra.mxu0 %v1114
    %1284 = vmatprep.subr.bf16.mxu0 %v1119
    %1285 = vmatpush1.bf16.msra.mxu0 %v1118
    %1286 = vmatprep.subr.bf16.mxu0 %v1123
    %1287 = vmatpush1.bf16.msra.mxu0 %v1122
    %1288 = vmatprep.subr.bf16.mxu0 %v1127
    %1289 = vmatpush1.bf16.msra.mxu0 %v1126
    %1290 = vmatprep.mubr.bf16.mxu0 %v680
    %1291 = vmatmul.mubr.bf16.gmra.mrb[0].mxu0 %v679
    %v1292 = vpop.f32.mrb[0].mxu0
    %v1293 = vadd.f32 0.0, %v1292
    %v1294 = vpop.f32.mrb[0].mxu0
    %v1295 = vadd.f32 0.0, %v1294
    %v1296 = vpop.f32.mrb[0].mxu0
    %v1297 = vpop.f32.mrb[0].mxu0
    %1298 = vdwg.mxu0
    %1299 = vmatprep.subr.bf16.mxu0 %v1131
    %1300 = vmatpush1.bf16.msra.mxu0 %v1130
    %1301 = vmatprep.subr.bf16.mxu0 %v1135
    %1302 = vmatpush1.bf16.msra.mxu0 %v1134
    %1303 = vmatprep.subr.bf16.mxu0 %v1139
    %1304 = vmatpush1.bf16.msra.mxu0 %v1138
    %1305 = vmatprep.subr.bf16.mxu0 %v1143
    %1306 = vmatpush1.bf16.msra.mxu0 %v1142
    %1307 = vmatprep.subr.bf16.mxu0 %v1147
    %1308 = vmatpush1.bf16.msra.mxu0 %v1146
    %1309 = vmatprep.subr.bf16.mxu0 %v1151
    %1310 = vmatpush1.bf16.msra.mxu0 %v1150
    %1311 = vmatprep.subr.bf16.mxu0 %v1155
    %1312 = vmatpush1.bf16.msra.mxu0 %v1154
    %1313 = vmatprep.subr.bf16.mxu0 %v1159
    %1314 = vmatpush1.bf16.msra.mxu0 %v1158
    %1315 = vmatprep.subr.bf16.mxu0 0
    %1316 = vmatpush1.bf16.msra.mxu0 0
    %1317 = vmatprep.subr.bf16.mxu0 0
    %1318 = vmatpush1.bf16.msra.mxu0 0
    %1319 = vmatprep.subr.bf16.mxu0 0
    %1320 = vmatpush1.bf16.msra.mxu0 0
    %1321 = vmatprep.subr.bf16.mxu0 0
    %1322 = vmatpush1.bf16.msra.mxu0 0
    %1323 = vmatprep.subr.bf16.mxu0 0
    %1324 = vmatpush1.bf16.msra.mxu0 0
    %1325 = vmatprep.subr.bf16.mxu0 0
    %1326 = vmatpush1.bf16.msra.mxu0 0
    %1327 = vmatprep.subr.bf16.mxu0 0
    %1328 = vmatpush1.bf16.msra.mxu0 0
    %1329 = vmatprep.subr.bf16.mxu0 0
    %1330 = vmatpush1.bf16.msra.mxu0 0
    %1331 = vmatprep.mubr.bf16.mxu0 0
    %1332 = vmatmul.mubr.bf16.gmra.mrb[0].mxu0 %v681
    %v1333 = vpop.f32.mrb[0].mxu0
    %v1334 = vadd.f32 %v1293, %v1333
    %v1335 = vpop.f32.mrb[0].mxu0
    %v1336 = vadd.f32 %v1295, %v1335
    %v1337 = vpop.f32.mrb[0].mxu0
    %v1338 = vpop.f32.mrb[0].mxu0
    %1339 = vdwg.mxu0
    %1340 = vmatprep.subr.bf16.mxu0 %v1069
    %1341 = vmatpush1.bf16.msra.mxu0 %v1068
    %1342 = vmatprep.subr.bf16.mxu0 %v1073
    %1343 = vmatpush1.bf16.msra.mxu0 %v1072
    %1344 = vmatprep.subr.bf16.mxu0 %v1077
    %1345 = vmatpush1.bf16.msra.mxu0 %v1076
    %1346 = vmatprep.subr.bf16.mxu0 %v1081
    %1347 = vmatpush1.bf16.msra.mxu0 %v1080
    %1348 = vmatprep.subr.bf16.mxu0 %v1085
    %1349 = vmatpush1.bf16.msra.mxu0 %v1084
    %1350 = vmatprep.subr.bf16.mxu0 %v1089
    %1351 = vmatpush1.bf16.msra.mxu0 %v1088
    %1352 = vmatprep.subr.bf16.mxu0 %v1093
    %1353 = vmatpush1.bf16.msra.mxu0 %v1092
    %1354 = vmatprep.subr.bf16.mxu0 %v1097
    %1355 = vmatpush1.bf16.msra.mxu0 %v1096
    %1356 = vmatprep.subr.bf16.mxu0 %v1101
    %1357 = vmatpush1.bf16.msra.mxu0 %v1100
    %1358 = vmatprep.subr.bf16.mxu0 %v1105
    %1359 = vmatpush1.bf16.msra.mxu0 %v1104
    %1360 = vmatprep.subr.bf16.mxu0 %v1109
    %1361 = vmatpush1.bf16.msra.mxu0 %v1108
    %1362 = vmatprep.subr.bf16.mxu0 %v1113
    %1363 = vmatpush1.bf16.msra.mxu0 %v1112
    %1364 = vmatprep.subr.bf16.mxu0 %v1117
    %1365 = vmatpush1.bf16.msra.mxu0 %v1116
    %1366 = vmatprep.subr.bf16.mxu0 %v1121
    %1367 = vmatpush1.bf16.msra.mxu0 %v1120
    %1368 = vmatprep.subr.bf16.mxu0 %v1125
    %1369 = vmatpush1.bf16.msra.mxu0 %v1124
    %1370 = vmatprep.subr.bf16.mxu0 %v1129
    %1371 = vmatpush1.bf16.msra.mxu0 %v1128
    %1372 = vmatprep.mubr.bf16.mxu0 %v680
    %1373 = vmatmul.mubr.bf16.gmra.mrb[0].mxu0 %v679
    %v1374 = vpop.f32.mrb[0].mxu0
    %v1375 = vadd.f32 0.0, %v1374
    %v1376 = vpop.f32.mrb[0].mxu0
    %v1377 = vadd.f32 0.0, %v1376
    %v1378 = vpop.f32.mrb[0].mxu0
    %v1379 = vpop.f32.mrb[0].mxu0
    %1380 = vdwg.mxu0
    %1381 = vmatprep.subr.bf16.mxu0 %v1133
    %1382 = vmatpush1.bf16.msra.mxu0 %v1132
    %1383 = vmatprep.subr.bf16.mxu0 %v1137
    %1384 = vmatpush1.bf16.msra.mxu0 %v1136
    %1385 = vmatprep.subr.bf16.mxu0 %v1141
    %1386 = vmatpush1.bf16.msra.mxu0 %v1140
    %1387 = vmatprep.subr.bf16.mxu0 %v1145
    %1388 = vmatpush1.bf16.msra.mxu0 %v1144
    %1389 = vmatprep.subr.bf16.mxu0 %v1149
    %1390 = vmatpush1.bf16.msra.mxu0 %v1148
    %1391 = vmatprep.subr.bf16.mxu0 %v1153
    %1392 = vmatpush1.bf16.msra.mxu0 %v1152
    %1393 = vmatprep.subr.bf16.mxu0 %v1157
    %1394 = vmatpush1.bf16.msra.mxu0 %v1156
    %1395 = vmatprep.subr.bf16.mxu0 %v1161
    %1396 = vmatpush1.bf16.msra.mxu0 %v1160
    %1397 = vmatprep.subr.bf16.mxu0 0
    %1398 = vmatpush1.bf16.msra.mxu0 0
    %1399 = vmatprep.subr.bf16.mxu0 0
    %1400 = vmatpush1.bf16.msra.mxu0 0
    %1401 = vmatprep.subr.bf16.mxu0 0
    %1402 = vmatpush1.bf16.msra.mxu0 0
    %1403 = vmatprep.subr.bf16.mxu0 0
    %1404 = vmatpush1.bf16.msra.mxu0 0
    %1405 = vmatprep.subr.bf16.mxu0 0
    %1406 = vmatpush1.bf16.msra.mxu0 0
    %1407 = vmatprep.subr.bf16.mxu0 0
    %1408 = vmatpush1.bf16.msra.mxu0 0
    %1409 = vmatprep.subr.bf16.mxu0 0
    %1410 = vmatpush1.bf16.msra.mxu0 0
    %1411 = vmatprep.subr.bf16.mxu0 0
    %1412 = vmatpush1.bf16.msra.mxu0 0
    %1413 = vmatprep.mubr.bf16.mxu0 0
    %1414 = vmatmul.mubr.bf16.gmra.mrb[0].mxu0 %v681
    %v1415 = vpop.f32.mrb[0].mxu0
    %v1416 = vadd.f32 %v1375, %v1415
    %v1417 = vpop.f32.mrb[0].mxu0
    %v1418 = vadd.f32 %v1377, %v1417
    %v1419 = vpop.f32.mrb[0].mxu0
    %v1420 = vpop.f32.mrb[0].mxu0
    %1421 = vdwg.mxu0
    %v1422 = vxor.u32 %v1334, 2147483648
    %v1423 = vmul.f32 %v1422, 1.442695
    %v1424 = vpow.pop %v1423
    %v1425 = vadd.f32 %v1424, 1.0
    %v1426 = vrcp.pop %v1425
    %v1427 = vmul.f32 1.0, %v1426
    %v1428 = vxor.u32 %v1336, 2147483648
    %v1429 = vmul.f32 %v1428, 1.442695
    %v1430 = vpow.pop %v1429
    %v1431 = vadd.f32 %v1430, 1.0
    %v1432 = vrcp.pop %v1431
    %v1433 = vmul.f32 1.0, %v1432
    %v1434 = vxor.u32 %v1416, 2147483648
    %v1435 = vmul.f32 %v1434, 1.442695
    %v1436 = vpow.pop %v1435
    %v1437 = vadd.f32 %v1436, 1.0
    %v1438 = vrcp.pop %v1437
    %v1439 = vmul.f32 1.0, %v1438
    %v1440 = vtanh.pop %v1418
    %v1441 = vmul.f32 %v126, %v1433
    %v1442 = vmul.f32 %v1427, %v1440
    %v1443 = vadd.f32 %v1441, %v1442
    %v1444 = vtanh.pop %v1443
    %v1445 = vmul.f32 %v1439, %v1444
    %v1446 = vpack.c.bf16 %v1445, %v1445
    %v1447 = vld [vmem:[%s7] sm:$0xff]
    %v1448 = vld [vmem:[%s7 + $0x8] sm:$0xff]
    %v1449 = vld [vmem:[%s7 + $0x10] sm:$0xff]
    %v1450 = vld [vmem:[%s7 + $0x18] sm:$0xff]
    %v1451 = vld [vmem:[%s7 + $0x20] sm:$0xff]
    %v1452 = vld [vmem:[%s7 + $0x28] sm:$0xff]
    %v1453 = vld [vmem:[%s7 + $0x30] sm:$0xff]
    %v1454 = vld [vmem:[%s7 + $0x38] sm:$0xff]
    %v1455 = vld [vmem:[%s7 + $0x40] sm:$0xff]
    %v1456 = vld [vmem:[%s7 + $0x48] sm:$0xff]
    %v1457 = vld [vmem:[%s7 + $0x50] sm:$0xff]
    %v1458 = vld [vmem:[%s7 + $0x58] sm:$0xff]
    %v1459 = vld [vmem:[%s7 + $0x60] sm:$0xff]
    %v1460 = vld [vmem:[%s7 + $0x68] sm:$0xff]
    %v1461 = vld [vmem:[%s7 + $0x70] sm:$0xff]
    %v1462 = vld [vmem:[%s7 + $0x78] sm:$0xff]
    %v1463 = vld [vmem:[%s7 + $0x80] sm:$0xff]
    %v1464 = vld [vmem:[%s7 + $0x88] sm:$0xff]
    %v1465 = vld [vmem:[%s7 + $0x90] sm:$0xff]
    %v1466 = vld [vmem:[%s7 + $0x98] sm:$0xff]
    %v1467 = vld [vmem:[%s7 + $0xa0] sm:$0xff]
    %v1468 = vld [vmem:[%s7 + $0xa8] sm:$0xff]
    %v1469 = vld [vmem:[%s7 + $0xb0] sm:$0xff]
    %v1470 = vld [vmem:[%s7 + $0xb8] sm:$0xff]
    %v1471 = vld [vmem:[%s7 + $0xc0] sm:$0xff]
    %v1472 = vld [vmem:[%s7 + $0xc8] sm:$0xff]
    %v1473 = vld [vmem:[%s7 + $0xd0] sm:$0xff]
    %v1474 = vld [vmem:[%s7 + $0xd8] sm:$0xff]
    %v1475 = vld [vmem:[%s7 + $0xe0] sm:$0xff]
    %v1476 = vld [vmem:[%s7 + $0xe8] sm:$0xff]
    %v1477 = vld [vmem:[%s7 + $0xf0] sm:$0xff]
    %v1478 = vld [vmem:[%s7 + $0xf8] sm:$0xff]
    %v1511 = vunpack.c.l.b16 %v1447
    %v1512 = vunpack.c.h.b16 %v1447
    %v1513 = vunpack.c.l.b16 %v1448
    %v1514 = vunpack.c.h.b16 %v1448
    %v1515 = vunpack.c.l.b16 %v1449
    %v1516 = vunpack.c.h.b16 %v1449
    %v1517 = vunpack.c.l.b16 %v1450
    %v1518 = vunpack.c.h.b16 %v1450
    %v1519 = vunpack.c.l.b16 %v1451
    %v1520 = vunpack.c.h.b16 %v1451
    %v1521 = vunpack.c.l.b16 %v1452
    %v1522 = vunpack.c.h.b16 %v1452
    %v1523 = vunpack.c.l.b16 %v1453
    %v1524 = vunpack.c.h.b16 %v1453
    %v1525 = vunpack.c.l.b16 %v1454
    %v1526 = vunpack.c.h.b16 %v1454
    %v1527 = vunpack.c.l.b16 %v1455
    %v1528 = vunpack.c.h.b16 %v1455
    %v1529 = vunpack.c.l.b16 %v1456
    %v1530 = vunpack.c.h.b16 %v1456
    %v1531 = vunpack.c.l.b16 %v1457
    %v1532 = vunpack.c.h.b16 %v1457
    %v1533 = vunpack.c.l.b16 %v1458
    %v1534 = vunpack.c.h.b16 %v1458
    %v1535 = vunpack.c.l.b16 %v1459
    %v1536 = vunpack.c.h.b16 %v1459
    %v1537 = vunpack.c.l.b16 %v1460
    %v1538 = vunpack.c.h.b16 %v1460
    %v1539 = vunpack.c.l.b16 %v1461
    %v1540 = vunpack.c.h.b16 %v1461
    %v1541 = vunpack.c.l.b16 %v1462
    %v1542 = vunpack.c.h.b16 %v1462
    %v1543 = vunpack.c.l.b16 %v1463
    %v1544 = vunpack.c.h.b16 %v1463
    %v1545 = vunpack.c.l.b16 %v1464
    %v1546 = vunpack.c.h.b16 %v1464
    %v1547 = vunpack.c.l.b16 %v1465
    %v1548 = vunpack.c.h.b16 %v1465
    %v1549 = vunpack.c.l.b16 %v1466
    %v1550 = vunpack.c.h.b16 %v1466
    %v1551 = vunpack.c.l.b16 %v1467
    %v1552 = vunpack.c.h.b16 %v1467
    %v1553 = vunpack.c.l.b16 %v1468
    %v1554 = vunpack.c.h.b16 %v1468
    %v1555 = vunpack.c.l.b16 %v1469
    %v1556 = vunpack.c.h.b16 %v1469
    %v1557 = vunpack.c.l.b16 %v1470
    %v1558 = vunpack.c.h.b16 %v1470
    %v1559 = vunpack.c.l.b16 %v1471
    %v1560 = vunpack.c.h.b16 %v1471
    %v1561 = vunpack.c.l.b16 %v1472
    %v1562 = vunpack.c.h.b16 %v1472
    %v1563 = vunpack.c.l.b16 %v1473
    %v1564 = vunpack.c.h.b16 %v1473
    %v1565 = vunpack.c.l.b16 %v1474
    %v1566 = vunpack.c.h.b16 %v1474
    %v1567 = vunpack.c.l.b16 %v1475
    %v1568 = vunpack.c.h.b16 %v1475
    %v1569 = vunpack.c.l.b16 %v1476
    %v1570 = vunpack.c.h.b16 %v1476
    %v1571 = vunpack.c.l.b16 %v1477
    %v1572 = vunpack.c.h.b16 %v1477
    %v1573 = vunpack.c.l.b16 %v1478
    %v1574 = vunpack.c.h.b16 %v1478
    %v1575 = vpack.c.b16 %v1515, %v1511
    %v1576 = vpack.c.b16 %v1516, %v1512
    %v1577 = vpack.c.b16 %v1517, %v1513
    %v1578 = vpack.c.b16 %v1518, %v1514
    %v1579 = vpack.c.b16 %v1523, %v1519
    %v1580 = vpack.c.b16 %v1524, %v1520
    %v1581 = vpack.c.b16 %v1525, %v1521
    %v1582 = vpack.c.b16 %v1526, %v1522
    %v1583 = vpack.c.b16 %v1531, %v1527
    %v1584 = vpack.c.b16 %v1532, %v1528
    %v1585 = vpack.c.b16 %v1533, %v1529
    %v1586 = vpack.c.b16 %v1534, %v1530
    %v1587 = vpack.c.b16 %v1539, %v1535
    %v1588 = vpack.c.b16 %v1540, %v1536
    %v1589 = vpack.c.b16 %v1541, %v1537
    %v1590 = vpack.c.b16 %v1542, %v1538
    %v1591 = vpack.c.b16 %v1547, %v1543
    %v1592 = vpack.c.b16 %v1548, %v1544
    %v1593 = vpack.c.b16 %v1549, %v1545
    %v1594 = vpack.c.b16 %v1550, %v1546
    %v1595 = vpack.c.b16 %v1555, %v1551
    %v1596 = vpack.c.b16 %v1556, %v1552
    %v1597 = vpack.c.b16 %v1557, %v1553
    %v1598 = vpack.c.b16 %v1558, %v1554
    %v1599 = vpack.c.b16 %v1563, %v1559
    %v1600 = vpack.c.b16 %v1564, %v1560
    %v1601 = vpack.c.b16 %v1565, %v1561
    %v1602 = vpack.c.b16 %v1566, %v1562
    %v1603 = vpack.c.b16 %v1571, %v1567
    %v1604 = vpack.c.b16 %v1572, %v1568
    %v1605 = vpack.c.b16 %v1573, %v1569
    %v1606 = vpack.c.b16 %v1574, %v1570
    %1639 = vmatprep.subr.bf16.mxu0 %v1576
    %1640 = vmatpush1.bf16.msra.mxu0 %v1575
    %1641 = vmatprep.subr.bf16.mxu0 %v1580
    %1642 = vmatpush1.bf16.msra.mxu0 %v1579
    %1643 = vmatprep.subr.bf16.mxu0 %v1584
    %1644 = vmatpush1.bf16.msra.mxu0 %v1583
    %1645 = vmatprep.subr.bf16.mxu0 %v1588
    %1646 = vmatpush1.bf16.msra.mxu0 %v1587
    %1647 = vmatprep.subr.bf16.mxu0 %v1592
    %1648 = vmatpush1.bf16.msra.mxu0 %v1591
    %1649 = vmatprep.subr.bf16.mxu0 %v1596
    %1650 = vmatpush1.bf16.msra.mxu0 %v1595
    %1651 = vmatprep.subr.bf16.mxu0 %v1600
    %1652 = vmatpush1.bf16.msra.mxu0 %v1599
    %1653 = vmatprep.subr.bf16.mxu0 %v1604
    %1654 = vmatpush1.bf16.msra.mxu0 %v1603
    %1655 = vmatprep.subr.bf16.mxu0 0
    %1656 = vmatpush1.bf16.msra.mxu0 0
    %1657 = vmatprep.subr.bf16.mxu0 0
    %1658 = vmatpush1.bf16.msra.mxu0 0
    %1659 = vmatprep.subr.bf16.mxu0 0
    %1660 = vmatpush1.bf16.msra.mxu0 0
    %1661 = vmatprep.subr.bf16.mxu0 0
    %1662 = vmatpush1.bf16.msra.mxu0 0
    %1663 = vmatprep.subr.bf16.mxu0 0
    %1664 = vmatpush1.bf16.msra.mxu0 0
    %1665 = vmatprep.subr.bf16.mxu0 0
    %1666 = vmatpush1.bf16.msra.mxu0 0
    %1667 = vmatprep.subr.bf16.mxu0 0
    %1668 = vmatpush1.bf16.msra.mxu0 0
    %1669 = vmatprep.subr.bf16.mxu0 0
    %1670 = vmatpush1.bf16.msra.mxu0 0
    %1671 = vmatprep.mubr.bf16.mxu0 0
    %1672 = vmatmul.mubr.bf16.gmra.mrb[0].mxu0 %v1446
    %v1673 = vpop.f32.mrb[0].mxu0
    %v1674 = vadd.f32 0.0, %v1673
    %v1675 = vpop.f32.mrb[0].mxu0
    %v1676 = vadd.f32 0.0, %v1675
    %v1677 = vpop.f32.mrb[0].mxu0
    %v1678 = vpop.f32.mrb[0].mxu0
    %1679 = vdwg.mxu0
    %1680 = vmatprep.subr.bf16.mxu0 %v1578
    %1681 = vmatpush1.bf16.msra.mxu0 %v1577
    %1682 = vmatprep.subr.bf16.mxu0 %v1582
    %1683 = vmatpush1.bf16.msra.mxu0 %v1581
    %1684 = vmatprep.subr.bf16.mxu0 %v1586
    %1685 = vmatpush1.bf16.msra.mxu0 %v1585
    %1686 = vmatprep.subr.bf16.mxu0 %v1590
    %1687 = vmatpush1.bf16.msra.mxu0 %v1589
    %1688 = vmatprep.subr.bf16.mxu0 %v1594
    %1689 = vmatpush1.bf16.msra.mxu0 %v1593
    %1690 = vmatprep.subr.bf16.mxu0 %v1598
    %1691 = vmatpush1.bf16.msra.mxu0 %v1597
    %1692 = vmatprep.subr.bf16.mxu0 %v1602
    %1693 = vmatpush1.bf16.msra.mxu0 %v1601
    %1694 = vmatprep.subr.bf16.mxu0 %v1606
    %1695 = vmatpush1.bf16.msra.mxu0 %v1605
    %1696 = vmatprep.subr.bf16.mxu0 0
    %1697 = vmatpush1.bf16.msra.mxu0 0
    %1698 = vmatprep.subr.bf16.mxu0 0
    %1699 = vmatpush1.bf16.msra.mxu0 0
    %1700 = vmatprep.subr.bf16.mxu0 0
    %1701 = vmatpush1.bf16.msra.mxu0 0
    %1702 = vmatprep.subr.bf16.mxu0 0
    %1703 = vmatpush1.bf16.msra.mxu0 0
    %1704 = vmatprep.subr.bf16.mxu0 0
    %1705 = vmatpush1.bf16.msra.mxu0 0
    %1706 = vmatprep.subr.bf16.mxu0 0
    %1707 = vmatpush1.bf16.msra.mxu0 0
    %1708 = vmatprep.subr.bf16.mxu0 0
    %1709 = vmatpush1.bf16.msra.mxu0 0
    %1710 = vmatprep.subr.bf16.mxu0 0
    %1711 = vmatpush1.bf16.msra.mxu0 0
    %1712 = vmatprep.mubr.bf16.mxu0 0
    %1713 = vmatmul.mubr.bf16.gmra.mrb[0].mxu0 %v1446
    %v1714 = vpop.f32.mrb[0].mxu0
    %v1715 = vadd.f32 0.0, %v1714
    %v1716 = vpop.f32.mrb[0].mxu0
    %v1717 = vadd.f32 0.0, %v1716
    %v1718 = vpop.f32.mrb[0].mxu0
    %v1719 = vpop.f32.mrb[0].mxu0
    %1720 = vdwg.mxu0
    %v1721 = vld [vmem:[%s14] sm:$0xf]
    %v1724 = vlaneseq
    %v1725 = vshrl.u32 %v1724, 7
    %v1726 = vsub.s32 %v566, %v1725
    %v1727 = vrot.slane %v519, %v1726
    %v1728 = vlaneseq
    %v1729 = vshrl.u32 %v1728, 7
    %v1730 = vsub.s32 %v566, %v1729
    %v1731 = vrot.slane %v520, %v1730
    %v1732 = vsel %vm575, %v1731, %v1727
    %v1733 = vsel %vm587, %v1732, 0
    %v1736 = vsel %vm591, %v1721, 0
    %1738 = vmatprep.subr.mxu0 0.0
    %1739 = vmatpush1.msra.mxu0 %v1736
    %1740 = vmatprep.subr.mxu0 0.0
    %1741 = vmatpush1.msra.mxu0 0.0
    %1742 = vmatprep.subr.mxu0 0.0
    %1743 = vmatpush1.msra.mxu0 0.0
    %1744 = vmatprep.subr.mxu0 0.0
    %1745 = vmatpush1.msra.mxu0 0.0
    %1746 = vmatprep.subr.mxu0 0.0
    %1747 = vmatpush1.msra.mxu0 0.0
    %1748 = vmatprep.subr.mxu0 0.0
    %1749 = vmatpush1.msra.mxu0 0.0
    %1750 = vmatprep.subr.mxu0 0.0
    %1751 = vmatpush1.msra.mxu0 0.0
    %1752 = vmatprep.subr.mxu0 0.0
    %1753 = vmatpush1.msra.mxu0 0.0
    %1754 = vmatprep.subr.mxu0 0.0
    %1755 = vmatpush1.msra.mxu0 0.0
    %1756 = vmatprep.subr.mxu0 0.0
    %1757 = vmatpush1.msra.mxu0 0.0
    %1758 = vmatprep.subr.mxu0 0.0
    %1759 = vmatpush1.msra.mxu0 0.0
    %1760 = vmatprep.subr.mxu0 0.0
    %1761 = vmatpush1.msra.mxu0 0.0
    %1762 = vmatprep.subr.mxu0 0.0
    %1763 = vmatpush1.msra.mxu0 0.0
    %1764 = vmatprep.subr.mxu0 0.0
    %1765 = vmatpush1.msra.mxu0 0.0
    %1766 = vmatprep.subr.mxu0 0.0
    %1767 = vmatpush1.msra.mxu0 0.0
    %1768 = vmatprep.subr.mxu0 0.0
    %1769 = vmatpush1.msra.mxu0 0.0
    %1770 = vmatprep.subr.mxu0 0.0
    %1771 = vmatpush1.msra.mxu0 0.0
    %1772 = vmatprep.subr.mxu0 0.0
    %1773 = vmatpush1.msra.mxu0 0.0
    %1774 = vmatprep.subr.mxu0 0.0
    %1775 = vmatpush1.msra.mxu0 0.0
    %1776 = vmatprep.subr.mxu0 0.0
    %1777 = vmatpush1.msra.mxu0 0.0
    %1778 = vmatprep.subr.mxu0 0.0
    %1779 = vmatpush1.msra.mxu0 0.0
    %1780 = vmatprep.subr.mxu0 0.0
    %1781 = vmatpush1.msra.mxu0 0.0
    %1782 = vmatprep.subr.mxu0 0.0
    %1783 = vmatpush1.msra.mxu0 0.0
    %1784 = vmatprep.subr.mxu0 0.0
    %1785 = vmatpush1.msra.mxu0 0.0
    %1786 = vmatprep.subr.mxu0 0.0
    %1787 = vmatpush1.msra.mxu0 0.0
    %1788 = vmatprep.subr.mxu0 0.0
    %1789 = vmatpush1.msra.mxu0 0.0
    %1790 = vmatprep.subr.mxu0 0.0
    %1791 = vmatpush1.msra.mxu0 0.0
    %1792 = vmatprep.subr.mxu0 0.0
    %1793 = vmatpush1.msra.mxu0 0.0
    %1794 = vmatprep.subr.mxu0 0.0
    %1795 = vmatpush1.msra.mxu0 0.0
    %1796 = vmatprep.subr.mxu0 0.0
    %1797 = vmatpush1.msra.mxu0 0.0
    %1798 = vmatprep.subr.mxu0 0.0
    %1799 = vmatpush1.msra.mxu0 0.0
    %1800 = vmatprep.subr.mxu0 0.0
    %1801 = vmatpush1.msra.mxu0 0.0
    %1802 = vmatprep.mubr.f32.mxu0 0.0
    %1803 = vmatmul.mubr.f32.gmra.mrb[0].mxu0 %v1733
    %v1804 = vpop.f32.mrb[0].mxu0
    %v1805 = vadd.f32 0.0, %v1804
    %v1806 = vpop.f32.mrb[0].mxu0
    %1807 = vdwg.mxu0
    %1808 = vrot.lane.b32.xlu0 %v1676, 32
    %v1809 = vpop.permute.xlu0 %1808
    %1810 = vrot.lane.b32.xlu0 %v1676, 64
    %v1811 = vpop.permute.xlu0 %1810
    %1812 = vrot.lane.b32.xlu0 %v1676, 96
    %v1813 = vpop.permute.xlu0 %1812
    %1814 = vrot.lane.b32.xlu0 %v1715, 64
    %v1815 = vpop.permute.xlu0 %1814
    %1816 = vrot.lane.b32.xlu0 %v1717, 64
    %v1817 = vpop.permute.xlu0 %1816
    %vm1818 = vcmp.lt.s32.totalorder %v566, 64
    %v1819 = vsel %vm1818, %v1815, %v1817
    %v1820 = vsel %vm1818, %v1817, %v1815
    %v1821 = vmul.f32 %v1674, %v1676
    %v1822 = vmul.f32 %v1674, %v1809
    %v1823 = vmul.f32 %v1674, %v1811
    %v1824 = vmul.f32 %v1674, %v1813
    %v1826 = vrot.slane %v1822, 6
    %v1829 = vrot.slane %v1823, 4
    %v1832 = vrot.slane %v1824, 2
    %v1834 = vsel %vm370, %v1821, %v1826
    %v1835 = vsel %vm591, %v1834, %v1829
    %vm1836 = vcmask 1045504
    %v1837 = vsel %vm1836, %v1835, %v1832
    %v1838 = vld [vmem:[%s15] sm:$0xff]
    %v1839 = vld [vmem:[%s15 + $0x8] sm:$0xff]
    %v1840 = vld [vmem:[%s15 + $0x10] sm:$0xff]
    %v1841 = vld [vmem:[%s15 + $0x18] sm:$0xff]
    %v1842 = vld [vmem:[%s15 + $0x20] sm:$0xff]
    %v1843 = vld [vmem:[%s15 + $0x28] sm:$0xff]
    %v1844 = vld [vmem:[%s15 + $0x30] sm:$0xff]
    %v1845 = vld [vmem:[%s15 + $0x38] sm:$0xff]
    %v1846 = vld [vmem:[%s15 + $0x40] sm:$0xff]
    %v1847 = vld [vmem:[%s15 + $0x48] sm:$0xff]
    %v1848 = vld [vmem:[%s15 + $0x50] sm:$0xff]
    %v1849 = vld [vmem:[%s15 + $0x58] sm:$0xff]
    %v1850 = vld [vmem:[%s15 + $0x60] sm:$0xff]
    %v1851 = vld [vmem:[%s15 + $0x68] sm:$0xff]
    %v1852 = vld [vmem:[%s15 + $0x70] sm:$0xff]
    %v1853 = vld [vmem:[%s15 + $0x78] sm:$0xff]
    %1854 = vmatprep.subr.mxu0 0.0
    %1855 = vmatpush1.msra.mxu0 %v1838
    %1856 = vmatprep.subr.mxu0 0.0
    %1857 = vmatpush1.msra.mxu0 %v1839
    %1858 = vmatprep.subr.mxu0 0.0
    %1859 = vmatpush1.msra.mxu0 %v1840
    %1860 = vmatprep.subr.mxu0 0.0
    %1861 = vmatpush1.msra.mxu0 %v1841
    %1862 = vmatprep.subr.mxu0 0.0
    %1863 = vmatpush1.msra.mxu0 %v1842
    %1864 = vmatprep.subr.mxu0 0.0
    %1865 = vmatpush1.msra.mxu0 %v1843
    %1866 = vmatprep.subr.mxu0 0.0
    %1867 = vmatpush1.msra.mxu0 %v1844
    %1868 = vmatprep.subr.mxu0 0.0
    %1869 = vmatpush1.msra.mxu0 %v1845
    %1870 = vmatprep.subr.mxu0 0.0
    %1871 = vmatpush1.msra.mxu0 %v1846
    %1872 = vmatprep.subr.mxu0 0.0
    %1873 = vmatpush1.msra.mxu0 %v1847
    %1874 = vmatprep.subr.mxu0 0.0
    %1875 = vmatpush1.msra.mxu0 %v1848
    %1876 = vmatprep.subr.mxu0 0.0
    %1877 = vmatpush1.msra.mxu0 %v1849
    %1878 = vmatprep.subr.mxu0 0.0
    %1879 = vmatpush1.msra.mxu0 %v1850
    %1880 = vmatprep.subr.mxu0 0.0
    %1881 = vmatpush1.msra.mxu0 %v1851
    %1882 = vmatprep.subr.mxu0 0.0
    %1883 = vmatpush1.msra.mxu0 %v1852
    %1884 = vmatprep.subr.mxu0 0.0
    %1885 = vmatpush1.msra.mxu0 %v1853
    %1886 = vmatprep.subr.mxu0 0.0
    %1887 = vmatpush1.msra.mxu0 0.0
    %1888 = vmatprep.subr.mxu0 0.0
    %1889 = vmatpush1.msra.mxu0 0.0
    %1890 = vmatprep.subr.mxu0 0.0
    %1891 = vmatpush1.msra.mxu0 0.0
    %1892 = vmatprep.subr.mxu0 0.0
    %1893 = vmatpush1.msra.mxu0 0.0
    %1894 = vmatprep.subr.mxu0 0.0
    %1895 = vmatpush1.msra.mxu0 0.0
    %1896 = vmatprep.subr.mxu0 0.0
    %1897 = vmatpush1.msra.mxu0 0.0
    %1898 = vmatprep.subr.mxu0 0.0
    %1899 = vmatpush1.msra.mxu0 0.0
    %1900 = vmatprep.subr.mxu0 0.0
    %1901 = vmatpush1.msra.mxu0 0.0
    %1902 = vmatprep.subr.mxu0 0.0
    %1903 = vmatpush1.msra.mxu0 0.0
    %1904 = vmatprep.subr.mxu0 0.0
    %1905 = vmatpush1.msra.mxu0 0.0
    %1906 = vmatprep.subr.mxu0 0.0
    %1907 = vmatpush1.msra.mxu0 0.0
    %1908 = vmatprep.subr.mxu0 0.0
    %1909 = vmatpush1.msra.mxu0 0.0
    %1910 = vmatprep.subr.mxu0 0.0
    %1911 = vmatpush1.msra.mxu0 0.0
    %1912 = vmatprep.subr.mxu0 0.0
    %1913 = vmatpush1.msra.mxu0 0.0
    %1914 = vmatprep.subr.mxu0 0.0
    %1915 = vmatpush1.msra.mxu0 0.0
    %1916 = vmatprep.subr.mxu0 0.0
    %1917 = vmatpush1.msra.mxu0 0.0
    %1918 = vmatprep.mubr.f32.mxu0 0.0
    %1919 = vmatmul.mubr.f32.gmra.mrb[0].mxu0 %v1837
    %v1920 = vpop.f32.mrb[0].mxu0
    %v1921 = vadd.f32 0.0, %v1920
    %v1922 = vpop.f32.mrb[0].mxu0
    %1923 = vdwg.mxu0
    %v1924 = vmul.f32 %v1921, 0.25
    %v1926 = vrot.slane %v1924, 2
    %v1928 = vmax.f32 %v1924, %v1926
    %v1929 = vrot.slane %v1924, 4
    %v1931 = vmax.f32 %v1928, %v1929
    %v1932 = vrot.slane %v1924, 6
    %v1934 = vmax.f32 %v1931, %v1932
    %v1935 = vsub.f32 %v1924, %v1934
    %v1936 = vmul.f32 %v1935, 1.442695
    %v1937 = vpow.pop %v1936
    %v1939 = vrot.slane %v1934, 6
    %v1941 = vsub.f32 %v1924, %v1939
    %v1942 = vmul.f32 %v1941, 1.442695
    %v1943 = vpow.pop %v1942
    %v1944 = vrot.slane %v1934, 4
    %v1946 = vsub.f32 %v1924, %v1944
    %v1947 = vmul.f32 %v1946, 1.442695
    %v1948 = vpow.pop %v1947
    %v1949 = vrot.slane %v1934, 2
    %v1951 = vsub.f32 %v1924, %v1949
    %v1952 = vmul.f32 %v1951, 1.442695
    %v1953 = vpow.pop %v1952
    %v1955 = vrot.slane %v1943, 2
    %v1957 = vadd.f32 %v1937, %v1955
    %v1959 = vrot.slane %v1948, 4
    %v1961 = vadd.f32 %v1957, %v1959
    %v1963 = vrot.slane %v1953, 6
    %v1965 = vadd.f32 %v1961, %v1963
    %v1966 = vrcp.pop %v1965
    %v1967 = vmul.f32 %v1805, %v1966
    %v1968 = vmul.f32 %v1937, %v1967
    %v1970 = vrot.slane %v1967, 6
    %v1972 = vmul.f32 %v1943, %v1970
    %v1973 = vrot.slane %v1967, 4
    %v1975 = vmul.f32 %v1948, %v1973
    %v1976 = vrot.slane %v1967, 2
    %v1978 = vmul.f32 %v1953, %v1976
    %v1979 = vsel %vm370, %v1968, %v1972
    %v1980 = vsel %vm591, %v1979, %v1975
    %v1981 = vsel %vm1836, %v1980, %v1978
    %v1982 = vld [vmem:[%s16] sm:$0xff]
    %v1983 = vld [vmem:[%s16 + $0x8] sm:$0xff]
    %vm1984 = vcmask 64512
    %v1986 = vsel %vm1984, %v1981, 0
    %1988 = vmatprep.subr.mxu0 %v1983
    %1989 = vmatpush1.msra.mxu0 %v1982
    %1990 = vmatprep.subr.mxu0 0.0
    %1991 = vmatpush1.msra.mxu0 0.0
    %1992 = vmatprep.subr.mxu0 0.0
    %1993 = vmatpush1.msra.mxu0 0.0
    %1994 = vmatprep.subr.mxu0 0.0
    %1995 = vmatpush1.msra.mxu0 0.0
    %1996 = vmatprep.subr.mxu0 0.0
    %1997 = vmatpush1.msra.mxu0 0.0
    %1998 = vmatprep.subr.mxu0 0.0
    %1999 = vmatpush1.msra.mxu0 0.0
    %2000 = vmatprep.subr.mxu0 0.0
    %2001 = vmatpush1.msra.mxu0 0.0
    %2002 = vmatprep.subr.mxu0 0.0
    %2003 = vmatpush1.msra.mxu0 0.0
    %2004 = vmatprep.subr.mxu0 0.0
    %2005 = vmatpush1.msra.mxu0 0.0
    %2006 = vmatprep.subr.mxu0 0.0
    %2007 = vmatpush1.msra.mxu0 0.0
    %2008 = vmatprep.subr.mxu0 0.0
    %2009 = vmatpush1.msra.mxu0 0.0
    %2010 = vmatprep.subr.mxu0 0.0
    %2011 = vmatpush1.msra.mxu0 0.0
    %2012 = vmatprep.subr.mxu0 0.0
    %2013 = vmatpush1.msra.mxu0 0.0
    %2014 = vmatprep.subr.mxu0 0.0
    %2015 = vmatpush1.msra.mxu0 0.0
    %2016 = vmatprep.subr.mxu0 0.0
    %2017 = vmatpush1.msra.mxu0 0.0
    %2018 = vmatprep.subr.mxu0 0.0
    %2019 = vmatpush1.msra.mxu0 0.0
    %2020 = vmatprep.subr.mxu0 0.0
    %2021 = vmatpush1.msra.mxu0 0.0
    %2022 = vmatprep.subr.mxu0 0.0
    %2023 = vmatpush1.msra.mxu0 0.0
    %2024 = vmatprep.subr.mxu0 0.0
    %2025 = vmatpush1.msra.mxu0 0.0
    %2026 = vmatprep.subr.mxu0 0.0
    %2027 = vmatpush1.msra.mxu0 0.0
    %2028 = vmatprep.subr.mxu0 0.0
    %2029 = vmatpush1.msra.mxu0 0.0
    %2030 = vmatprep.subr.mxu0 0.0
    %2031 = vmatpush1.msra.mxu0 0.0
    %2032 = vmatprep.subr.mxu0 0.0
    %2033 = vmatpush1.msra.mxu0 0.0
    %2034 = vmatprep.subr.mxu0 0.0
    %2035 = vmatpush1.msra.mxu0 0.0
    %2036 = vmatprep.subr.mxu0 0.0
    %2037 = vmatpush1.msra.mxu0 0.0
    %2038 = vmatprep.subr.mxu0 0.0
    %2039 = vmatpush1.msra.mxu0 0.0
    %2040 = vmatprep.subr.mxu0 0.0
    %2041 = vmatpush1.msra.mxu0 0.0
    %2042 = vmatprep.subr.mxu0 0.0
    %2043 = vmatpush1.msra.mxu0 0.0
    %2044 = vmatprep.subr.mxu0 0.0
    %2045 = vmatpush1.msra.mxu0 0.0
    %2046 = vmatprep.subr.mxu0 0.0
    %2047 = vmatpush1.msra.mxu0 0.0
    %2048 = vmatprep.subr.mxu0 0.0
    %2049 = vmatpush1.msra.mxu0 0.0
    %2050 = vmatprep.subr.mxu0 0.0
    %2051 = vmatpush1.msra.mxu0 0.0
    %2052 = vmatprep.mubr.f32.mxu0 0.0
    %2053 = vmatmul.mubr.f32.gmra.mrb[0].mxu0 %v1986
    %v2054 = vpop.f32.mrb[0].mxu0
    %v2055 = vadd.f32 0.0, %v2054
    %v2056 = vpop.f32.mrb[0].mxu0
    %v2057 = vadd.f32 0.0, %v2056
    %2058 = vdwg.mxu0
    %v2059 = vmul.f32 %v2055, %v1715
    %v2060 = vmul.f32 %v2057, %v1717
    %v2063 = vrot.slane %v1820, 6
    %v2064 = vrot.slane %v1819, 6
    %v2067 = vmul.f32 %v2055, %v2063
    %v2068 = vmul.f32 %v2057, %v2064
    %v2071 = vrot.slane %v2067, 2
    %v2072 = vrot.slane %v2068, 2
    %v2075 = vadd.f32 %v2059, %v2071
    %v2076 = vadd.f32 %v2060, %v2072
    %v2079 = vrot.slane %v1717, 4
    %v2080 = vrot.slane %v1715, 4
    %v2083 = vmul.f32 %v2055, %v2079
    %v2084 = vmul.f32 %v2057, %v2080
    %v2087 = vrot.slane %v2083, 4
    %v2088 = vrot.slane %v2084, 4
    %v2091 = vadd.f32 %v2075, %v2087
    %v2092 = vadd.f32 %v2076, %v2088
    %v2093 = vrot.slane %v1819, 2
    %v2094 = vrot.slane %v1820, 2
    %v2097 = vmul.f32 %v2055, %v2093
    %v2098 = vmul.f32 %v2057, %v2094
    %v2101 = vrot.slane %v2097, 6
    %v2102 = vrot.slane %v2098, 6
    %v2105 = vadd.f32 %v2091, %v2101
    %v2106 = vadd.f32 %v2092, %v2102
    %v2107 = vpack.c.bf16 %v2105, %v2105
    %v2108 = vpack.c.bf16 %v2106, %v2106
    %v2109 = vld [vmem:[#allocation7] sm:$0xf]
    %v2110 = vld [vmem:[#allocation7 + $0x4] sm:$0xf]
    %v2111 = vld [vmem:[#allocation7 + $0x8] sm:$0xf]
    %v2112 = vld [vmem:[#allocation7 + $0xc] sm:$0xf]
    %v2113 = vld [vmem:[#allocation7 + $0x10] sm:$0xf]
    %v2114 = vld [vmem:[#allocation7 + $0x14] sm:$0xf]
    %v2115 = vld [vmem:[#allocation7 + $0x18] sm:$0xf]
    %v2116 = vld [vmem:[#allocation7 + $0x1c] sm:$0xf]
    %v2117 = vld [vmem:[#allocation7 + $0x20] sm:$0xf]
    %v2118 = vld [vmem:[#allocation7 + $0x24] sm:$0xf]
    %v2119 = vld [vmem:[#allocation7 + $0x28] sm:$0xf]
    %v2120 = vld [vmem:[#allocation7 + $0x2c] sm:$0xf]
    %v2121 = vld [vmem:[#allocation7 + $0x30] sm:$0xf]
    %v2122 = vld [vmem:[#allocation7 + $0x34] sm:$0xf]
    %v2123 = vld [vmem:[#allocation7 + $0x38] sm:$0xf]
    %v2124 = vld [vmem:[#allocation7 + $0x3c] sm:$0xf]
    %v2125 = vld [vmem:[#allocation7 + $0x40] sm:$0xf]
    %v2126 = vld [vmem:[#allocation7 + $0x44] sm:$0xf]
    %v2127 = vld [vmem:[#allocation7 + $0x48] sm:$0xf]
    %v2128 = vld [vmem:[#allocation7 + $0x4c] sm:$0xf]
    %v2129 = vld [vmem:[#allocation7 + $0x50] sm:$0xf]
    %v2130 = vld [vmem:[#allocation7 + $0x54] sm:$0xf]
    %v2131 = vld [vmem:[#allocation7 + $0x58] sm:$0xf]
    %v2132 = vld [vmem:[#allocation7 + $0x5c] sm:$0xf]
    %v2133 = vld [vmem:[#allocation7 + $0x60] sm:$0xf]
    %v2134 = vld [vmem:[#allocation7 + $0x64] sm:$0xf]
    %v2135 = vld [vmem:[#allocation7 + $0x68] sm:$0xf]
    %v2136 = vld [vmem:[#allocation7 + $0x6c] sm:$0xf]
    %v2137 = vld [vmem:[#allocation7 + $0x70] sm:$0xf]
    %v2138 = vld [vmem:[#allocation7 + $0x74] sm:$0xf]
    %v2139 = vld [vmem:[#allocation7 + $0x78] sm:$0xf]
    %v2140 = vld [vmem:[#allocation7 + $0x7c] sm:$0xf]
    %v2173 = vunpack.c.l.b16 %v2109
    %v2174 = vunpack.c.l.b16 %v2110
    %v2175 = vunpack.c.l.b16 %v2111
    %v2176 = vunpack.c.l.b16 %v2112
    %v2177 = vunpack.c.l.b16 %v2113
    %v2178 = vunpack.c.l.b16 %v2114
    %v2179 = vunpack.c.l.b16 %v2115
    %v2180 = vunpack.c.l.b16 %v2116
    %v2181 = vunpack.c.l.b16 %v2117
    %v2182 = vunpack.c.l.b16 %v2118
    %v2183 = vunpack.c.l.b16 %v2119
    %v2184 = vunpack.c.l.b16 %v2120
    %v2185 = vunpack.c.l.b16 %v2121
    %v2186 = vunpack.c.l.b16 %v2122
    %v2187 = vunpack.c.l.b16 %v2123
    %v2188 = vunpack.c.l.b16 %v2124
    %v2189 = vunpack.c.l.b16 %v2125
    %v2190 = vunpack.c.l.b16 %v2126
    %v2191 = vunpack.c.l.b16 %v2127
    %v2192 = vunpack.c.l.b16 %v2128
    %v2193 = vunpack.c.l.b16 %v2129
    %v2194 = vunpack.c.l.b16 %v2130
    %v2195 = vunpack.c.l.b16 %v2131
    %v2196 = vunpack.c.l.b16 %v2132
    %v2197 = vunpack.c.l.b16 %v2133
    %v2198 = vunpack.c.l.b16 %v2134
    %v2199 = vunpack.c.l.b16 %v2135
    %v2200 = vunpack.c.l.b16 %v2136
    %v2201 = vunpack.c.l.b16 %v2137
    %v2202 = vunpack.c.l.b16 %v2138
    %v2203 = vunpack.c.l.b16 %v2139
    %v2204 = vunpack.c.l.b16 %v2140
    %v2205 = vpack.c.b16 %v2174, %v2173
    %v2206 = vpack.c.b16 %v2176, %v2175
    %v2207 = vpack.c.b16 %v2178, %v2177
    %v2208 = vpack.c.b16 %v2180, %v2179
    %v2209 = vpack.c.b16 %v2182, %v2181
    %v2210 = vpack.c.b16 %v2184, %v2183
    %v2211 = vpack.c.b16 %v2186, %v2185
    %v2212 = vpack.c.b16 %v2188, %v2187
    %v2213 = vpack.c.b16 %v2190, %v2189
    %v2214 = vpack.c.b16 %v2192, %v2191
    %v2215 = vpack.c.b16 %v2194, %v2193
    %v2216 = vpack.c.b16 %v2196, %v2195
    %v2217 = vpack.c.b16 %v2198, %v2197
    %v2218 = vpack.c.b16 %v2200, %v2199
    %v2219 = vpack.c.b16 %v2202, %v2201
    %v2220 = vpack.c.b16 %v2204, %v2203
    %2237 = vmatprep.subr.bf16.mxu0 0
    %2238 = vmatpush1.bf16.msra.mxu0 %v2205
    %2239 = vmatprep.subr.bf16.mxu0 0
    %2240 = vmatpush1.bf16.msra.mxu0 %v2206
    %2241 = vmatprep.subr.bf16.mxu0 0
    %2242 = vmatpush1.bf16.msra.mxu0 %v2207
    %2243 = vmatprep.subr.bf16.mxu0 0
    %2244 = vmatpush1.bf16.msra.mxu0 %v2208
    %2245 = vmatprep.subr.bf16.mxu0 0
    %2246 = vmatpush1.bf16.msra.mxu0 %v2209
    %2247 = vmatprep.subr.bf16.mxu0 0
    %2248 = vmatpush1.bf16.msra.mxu0 %v2210
    %2249 = vmatprep.subr.bf16.mxu0 0
    %2250 = vmatpush1.bf16.msra.mxu0 %v2211
    %2251 = vmatprep.subr.bf16.mxu0 0
    %2252 = vmatpush1.bf16.msra.mxu0 %v2212
    %2253 = vmatprep.subr.bf16.mxu0 0
    %2254 = vmatpush1.bf16.msra.mxu0 %v2213
    %2255 = vmatprep.subr.bf16.mxu0 0
    %2256 = vmatpush1.bf16.msra.mxu0 %v2214
    %2257 = vmatprep.subr.bf16.mxu0 0
    %2258 = vmatpush1.bf16.msra.mxu0 %v2215
    %2259 = vmatprep.subr.bf16.mxu0 0
    %2260 = vmatpush1.bf16.msra.mxu0 %v2216
    %2261 = vmatprep.subr.bf16.mxu0 0
    %2262 = vmatpush1.bf16.msra.mxu0 %v2217
    %2263 = vmatprep.subr.bf16.mxu0 0
    %2264 = vmatpush1.bf16.msra.mxu0 %v2218
    %2265 = vmatprep.subr.bf16.mxu0 0
    %2266 = vmatpush1.bf16.msra.mxu0 %v2219
    %2267 = vmatprep.subr.bf16.mxu0 0
    %2268 = vmatpush1.bf16.msra.mxu0 %v2220
    %2269 = vmatprep.mubr.bf16.mxu0 %v2108
    %2270 = vmatmul.mubr.bf16.gmra.mrb[0].mxu0 %v2107
    %v2271 = vpop.f32.mrb[0].mxu0
    %v2272 = vadd.f32 %v1445, %v2271
    %v2273 = vpop.f32.mrb[0].mxu0
    %v2274 = vpop.f32.mrb[0].mxu0
    %v2275 = vpop.f32.mrb[0].mxu0
    %2276 = vdwg.mxu0
    %v2277 = vld [vmem:[%s13] sm:$0xf]
    %v2279 = vsel %vm591, %v2277, 0
    %2281 = vmatprep.subr.mxu0 0.0
    %2282 = vmatpush1.msra.mxu0 %v2279
    %2283 = vmatprep.subr.mxu0 0.0
    %2284 = vmatpush1.msra.mxu0 0.0
    %2285 = vmatprep.subr.mxu0 0.0
    %2286 = vmatpush1.msra.mxu0 0.0
    %2287 = vmatprep.subr.mxu0 0.0
    %2288 = vmatpush1.msra.mxu0 0.0
    %2289 = vmatprep.subr.mxu0 0.0
    %2290 = vmatpush1.msra.mxu0 0.0
    %2291 = vmatprep.subr.mxu0 0.0
    %2292 = vmatpush1.msra.mxu0 0.0
    %2293 = vmatprep.subr.mxu0 0.0
    %2294 = vmatpush1.msra.mxu0 0.0
    %2295 = vmatprep.subr.mxu0 0.0
    %2296 = vmatpush1.msra.mxu0 0.0
    %2297 = vmatprep.subr.mxu0 0.0
    %2298 = vmatpush1.msra.mxu0 0.0
    %2299 = vmatprep.subr.mxu0 0.0
    %2300 = vmatpush1.msra.mxu0 0.0
    %2301 = vmatprep.subr.mxu0 0.0
    %2302 = vmatpush1.msra.mxu0 0.0
    %2303 = vmatprep.subr.mxu0 0.0
    %2304 = vmatpush1.msra.mxu0 0.0
    %2305 = vmatprep.subr.mxu0 0.0
    %2306 = vmatpush1.msra.mxu0 0.0
    %2307 = vmatprep.subr.mxu0 0.0
    %2308 = vmatpush1.msra.mxu0 0.0
    %2309 = vmatprep.subr.mxu0 0.0
    %2310 = vmatpush1.msra.mxu0 0.0
    %2311 = vmatprep.subr.mxu0 0.0
    %2312 = vmatpush1.msra.mxu0 0.0
    %2313 = vmatprep.subr.mxu0 0.0
    %2314 = vmatpush1.msra.mxu0 0.0
    %2315 = vmatprep.subr.mxu0 0.0
    %2316 = vmatpush1.msra.mxu0 0.0
    %2317 = vmatprep.subr.mxu0 0.0
    %2318 = vmatpush1.msra.mxu0 0.0
    %2319 = vmatprep.subr.mxu0 0.0
    %2320 = vmatpush1.msra.mxu0 0.0
    %2321 = vmatprep.subr.mxu0 0.0
    %2322 = vmatpush1.msra.mxu0 0.0
    %2323 = vmatprep.subr.mxu0 0.0
    %2324 = vmatpush1.msra.mxu0 0.0
    %2325 = vmatprep.subr.mxu0 0.0
    %2326 = vmatpush1.msra.mxu0 0.0
    %2327 = vmatprep.subr.mxu0 0.0
    %2328 = vmatpush1.msra.mxu0 0.0
    %2329 = vmatprep.subr.mxu0 0.0
    %2330 = vmatpush1.msra.mxu0 0.0
    %2331 = vmatprep.subr.mxu0 0.0
    %2332 = vmatpush1.msra.mxu0 0.0
    %2333 = vmatprep.subr.mxu0 0.0
    %2334 = vmatpush1.msra.mxu0 0.0
    %2335 = vmatprep.subr.mxu0 0.0
    %2336 = vmatpush1.msra.mxu0 0.0
    %2337 = vmatprep.subr.mxu0 0.0
    %2338 = vmatpush1.msra.mxu0 0.0
    %2339 = vmatprep.subr.mxu0 0.0
    %2340 = vmatpush1.msra.mxu0 0.0
    %2341 = vmatprep.subr.mxu0 0.0
    %2342 = vmatpush1.msra.mxu0 0.0
    %2343 = vmatprep.subr.mxu0 0.0
    %2344 = vmatpush1.msra.mxu0 0.0
    %2345 = vmatprep.mubr.f32.mxu0 0.0
    %2346 = vmatmul.mubr.f32.gmra.mrb[0].mxu0 %v1733
    %v2347 = vpop.f32.mrb[0].mxu0
    %v2348 = vadd.f32 0.0, %v2347
    %v2349 = vpop.f32.mrb[0].mxu0
    %2350 = vdwg.mxu0
    %v2351 = vmul.f32 %v2348, %v2272
    %v2352 = vsub.f32 1.0, %v2348
    %v2353 = vmul.f32 %v2352, %v125
    %v2354 = vadd.f32 %v2351, %v2353
    %2355 = vst [vmem:[%s17] sm:$0x3] %v2354
    %v2356 = vmul.f32 %v2348, %v1443
    %v2357 = vmul.f32 %v2352, %v126
    %v2358 = vadd.f32 %v2356, %v2357
    %2359 = vst [vmem:[%s18] sm:$0x3] %v2358
    %2360 = vst [vmem:[%s19] sm:$0x3] %v2348
    // Predicated region
    $region90: #{fn.1} parent=1 // pred_check
      _
    $region91: #{fn.1} parent=1 // pred_check_branch
      %2362 = sbr.rel (0) target = $region93
    $region92: #{fn.1} parent=1 // pred_region
      _
    $region93: #{fn.1} parent=1 // pred_fallthru
      _
    // Predicated region
    $region94: #{fn.1} parent=1 // pred_check
      _
    $region95: #{fn.1} parent=1 // pred_check_branch
      %2364 = sbr.rel (0) target = $region97
    $region96: #{fn.1} parent=1 // pred_region
      _
    $region97: #{fn.1} parent=1 // pred_fallthru
      _
    // Predicated region
    $region98: #{fn.1} parent=1 // pred_check
      _
    $region99: #{fn.1} parent=1 // pred_check_branch
      %2366 = sbr.rel (0) target = $region101
    $region100: #{fn.1} parent=1 // pred_region
      _
    $region101: #{fn.1} parent=1 // pred_fallthru
      _
    // Predicated region
    $region102: #{fn.1} parent=1 // pred_check
      _
    $region103: #{fn.1} parent=1 // pred_check_branch
      %2368 = sbr.rel (0) target = $region105
    $region104: #{fn.1} parent=1 // pred_region
      _
    $region105: #{fn.1} parent=1 // pred_fallthru
      _
    // Predicated region
    $region106: #{fn.1} parent=1 // pred_check
      _
    $region107: #{fn.1} parent=1 // pred_check_branch
      %2370 = sbr.rel (0) target = $region109
    $region108: #{fn.1} parent=1 // pred_region
      _
    $region109: #{fn.1} parent=1 // pred_fallthru
      _
    // Predicated region
    $region110: #{fn.1} parent=1 // pred_check
      _
    $region111: #{fn.1} parent=1 // pred_check_branch
      %2372 = sbr.rel (0) target = $region113
    $region112: #{fn.1} parent=1 // pred_region
      _
    $region113: #{fn.1} parent=1 // pred_fallthru
      _
    %2373 = vsyncpa [#allocation3], 1
    %2374 = vsyncpa [#allocation5], 1
    %2375 = vsyncpa [#allocation8], 1

</llo_original>
